<compile_context>
chip_gen: v5e
topology: v5e:2x2
jax: 0.10.0
libtpu: 0.0.40
codegen_flags: <defaults>
</compile_context>

<pallas_src>
import functools

import jax
import jax.numpy as jnp
from jax.experimental import pallas as pl
from jax.experimental.pallas import tpu as pltpu

NF = 64            # nf in the PyTorch module
CIN = 3            # RGB in
COUT = 3           # RGB out
CAT4 = 4 * NF      # channels of the dense-concat slab (c4)


def _device_kind():
    try:
        return jax.devices()[0].device_kind.lower()
    except Exception:  # pragma: no cover - defensive
        return ""


def _default_ep_dtype():
    # bf16 epilogue only where the VPU has native bf16 (v6e / v7x).
    k = _device_kind()
    return jnp.bfloat16 if ("v6" in k or "v7" in k) else jnp.float32


def _default_tile_p():
    # v7x has 64 MiB VMEM per TensorCore -> smaller tile; v5e/v6e have 128 MiB.
    return 8192 if "v7" in _device_kind() else 16384


def _vmem_limit_bytes():
    return (40 if "v7" in _device_kind() else 64) * 1024 * 1024


def _mulutc_kernel(x_ref,
                   w1, b1, w2, b2, w3, b3, w4, b4, w5s, b5, w6t, b6,
                   o_ref, slab, *, ep_dtype):
    """One pixel tile, channel-major.

    x_ref: (CIN, TP) bf16, o_ref: (COUT, TP) f32.
    slab:  (4*NF, TP) bf16 scratch holding the dense-concat activations (c4).
    w*:    bf16 (out, in) weights; w5s = [W5; W6[:, :4*NF]] (NF+COUT, 4*NF),
           w6t = W6[:, 4*NF:] (COUT, NF).
    b1..b5: (NF, 1) in ep_dtype; b6: (COUT, 1) f32.
    """

    def mm(w_r, h_bf16):
        # MXU matmul with bf16 operands and f32 accumulation.
        return jnp.dot(w_r[...], h_bf16, preferred_element_type=jnp.float32)

    def epi(acc_f32, b_r):
        # bias + relu in ep_dtype (bf16 on v6e/v7x, f32 on v5e), bf16 result.
        return jax.nn.relu(acc_f32.astype(ep_dtype) + b_r[...]).astype(jnp.bfloat16)

    # conv1 + relu (3 -> nf): write rows [0, NF) of the slab.
    slab[pl.ds(0, NF), :] = epi(mm(w1, x_ref[...]), b1)

    # DenseConv blocks 2..4: append 64 new channel rows to the slab; the next
    # layer reads the growing prefix view (no concat re-materialization).
    for k, (w_r, b_r) in enumerate(((w2, b2), (w3, b3), (w4, b4)), start=1):
        prefix = slab[pl.ds(0, k * NF), :]                  # (k*NF, TP) bf16
        slab[pl.ds(k * NF, NF), :] = epi(mm(w_r, prefix), b_r)

    # Fused conv5 + conv6[:, :4*NF]: one (NF+COUT, 4*NF) matmul over c4.
    c4 = slab[...]                                          # (4*NF, TP) bf16
    z = mm(w5s, c4)                                         # (NF+COUT, TP) f32
    f5 = epi(z[:NF], b5)                                    # (NF, TP) bf16
    # Finish conv6 with the remaining K=NF columns, then tanh (f32 epilogue).
    y = z[NF:] + mm(w6t, f5) + b6[...]                      # (COUT, TP) f32
    o_ref[...] = jnp.tanh(y)


def init_params(key, nf=NF):
    """MSRA init matching the PyTorch `Conv` module: kaiming_normal_ weights
    (fan_in, gain sqrt(2)) and zero biases.  Weight layout is the PyTorch
    1x1-conv layout (out_channels, in_channels); bias is (out_channels,)."""
    dims = [(nf, CIN), (nf, nf), (nf, 2 * nf), (nf, 3 * nf), (nf, 4 * nf),
            (COUT, 5 * nf)]
    params = []
    for k, (cout, cin) in zip(jax.random.split(key, len(dims)), dims):
        std = (2.0 / cin) ** 0.5
        w = jax.random.normal(k, (cout, cin), jnp.float32) * std
        b = jnp.zeros((cout,), jnp.float32)
        params.append((w, b))
    return params


@functools.partial(jax.jit, static_argnames=("tile_p", "ep_dtype"))
def _mulutc_forward_impl(x_nchw, params, tile_p, ep_dtype):
    N, C, H, W = x_nchw.shape
    assert C == CIN
    tile_p = max(128, (tile_p // 128) * 128)

    # NCHW -> channel-major (C, P) bf16: pixels on the lane axis.
    x_cp = jnp.transpose(x_nchw, (1, 0, 2, 3)).reshape(C, -1).astype(jnp.bfloat16)
    P = x_cp.shape[1]

    # Clamp the tile so the 1-D "parallel" grid has >= 2 steps whenever
    # possible (keeps both v7x TensorCores busy); harmless on v5e/v6e.
    if P > 128:
        half = -(-((P + 1) // 2) // 128) * 128
        tile_p_eff = max(128, min(tile_p, half))
    else:
        tile_p_eff = 128

    pad = (-P) % tile_p_eff
    if pad:
        x_cp = jnp.pad(x_cp, ((0, 0), (0, pad)))
    Pp = P + pad

    (w1, b1), (w2, b2), (w3, b3), (w4, b4), (w5, b5), (w6, b6) = params

    # Fuse conv6's c4-columns into conv5: stacked (NF+COUT, 4*NF) weight plus
    # a small (COUT, NF) tail for the f5 term.
    w5s = jnp.concatenate([w5, w6[:, :CAT4]], axis=0)
    w6t = w6[:, CAT4:]

    def wcast(w):
        return w.astype(jnp.bfloat16)

    def bcast(b, dt):
        return b.reshape(-1, 1).astype(dt)

    flat_params = [
        wcast(w1), bcast(b1, ep_dtype),
        wcast(w2), bcast(b2, ep_dtype),
        wcast(w3), bcast(b3, ep_dtype),
        wcast(w4), bcast(b4, ep_dtype),
        wcast(w5s), bcast(b5, ep_dtype),
        wcast(w6t), bcast(b6, jnp.float32),
    ]

    # Grid-invariant full-array blocks: weights/biases stay resident in VMEM.
    param_specs = [pl.BlockSpec(p.shape, lambda i: (0, 0)) for p in flat_params]

    kernel = functools.partial(_mulutc_kernel, ep_dtype=ep_dtype)

    out = pl.pallas_call(
        kernel,
        out_shape=jax.ShapeDtypeStruct((COUT, Pp), jnp.float32),
        grid_spec=pltpu.PrefetchScalarGridSpec(
            num_scalar_prefetch=0,
            grid=(Pp // tile_p_eff,),
            in_specs=[pl.BlockSpec((CIN, tile_p_eff), lambda i: (0, i))]
                     + param_specs,
            out_specs=pl.BlockSpec((COUT, tile_p_eff), lambda i: (0, i)),
            scratch_shapes=[pltpu.VMEM((CAT4, tile_p_eff), jnp.bfloat16)],
        ),
        compiler_params=pltpu.CompilerParams(
            dimension_semantics=("parallel",),
            vmem_limit_bytes=_vmem_limit_bytes(),
        ),
    )(x_cp, *flat_params)

    out = out[:, :P]  # drop pixel padding
    # (C, P) -> (C, N, H, W) -> NCHW
    return jnp.transpose(out.reshape(COUT, N, H, W), (1, 0, 2, 3))


def mulutc_forward(x_nchw, params, tile_p=None, ep_dtype=None):
    if tile_p is None:
        tile_p = _default_tile_p()
    if ep_dtype is None:
        ep_dtype = _default_ep_dtype()
    return _mulutc_forward_impl(x_nchw, params, tile_p, ep_dtype)


def mulutc_reference(x_nchw, params, ep_dtype=None):
    """Pure-JAX reference of the same forward.

    ep_dtype=None     -> pure-f32 module math.
    ep_dtype=bf16/f32 -> emulate the kernel numerics (bf16 MXU operands,
                         f32 accumulation, bias/relu in ep_dtype, bf16
                         activation storage, f32 final tanh)."""
    (w1, b1), (w2, b2), (w3, b3), (w4, b4), (w5, b5), (w6, b6) = params
    N, C, H, W = x_nchw.shape
    x = jnp.transpose(x_nchw, (0, 2, 3, 1)).reshape(-1, C).astype(jnp.float32)

    if ep_dtype is None:
        def hid(h, w, b):
            return jax.nn.relu(jnp.dot(h, w.T) + b)
        c = hid(x, w1, b1)
        for w, b in ((w2, b2), (w3, b3), (w4, b4), (w5, b5)):
            c = jnp.concatenate([c, hid(c, w, b)], -1)
        y = jnp.tanh(jnp.dot(c, w6.T) + b6)
    else:
        def mm(h_bf, w):
            return jnp.dot(h_bf, w.T.astype(jnp.bfloat16),
                           preferred_element_type=jnp.float32)

        def hid(h_bf, w, b):
            acc = mm(h_bf, w)
            return jax.nn.relu(acc.astype(ep_dtype)
                               + b.astype(ep_dtype)).astype(jnp.bfloat16)

        c = hid(x.astype(jnp.bfloat16), w1, b1)
        for w, b in ((w2, b2), (w3, b3), (w4, b4), (w5, b5)):
            c = jnp.concatenate([c, hid(c, w, b)], -1)
        y = jnp.tanh(mm(c, w6) + b6)

    return jnp.transpose(y.reshape(N, H, W, COUT), (0, 3, 1, 2))


if __name__ == "__main__":
    key = jax.random.PRNGKey(0)
    k_x, k_p = jax.random.split(key)

    # Small deterministic example input consistent with the module (RGB, NCHW).
    x = jax.random.uniform(k_x, (2, 3, 16, 16), jnp.float32)
    params = init_params(k_p, NF)

    # Default config (device-tuned tile size and epilogue dtype).
    y = jax.block_until_ready(mulutc_forward(x, params))
    assert y.shape == (2, 3, 16, 16)

    # Explicitly exercise both epilogue paths and multi-step grids
    # (weight residency across grid steps, megacore-style grid sizing).
    y_bf = jax.block_until_ready(
        mulutc_forward(x, params, tile_p=128, ep_dtype=jnp.bfloat16))
    y_f32 = jax.block_until_ready(
        mulutc_forward(x, params, tile_p=256, ep_dtype=jnp.float32))

    ref_module = mulutc_reference(x, params)                        # pure f32
    ref_bf = mulutc_reference(x, params, ep_dtype=jnp.bfloat16)
    ref_fp = mulutc_reference(x, params, ep_dtype=jnp.float32)
    ref_default = ref_bf if _default_ep_dtype() == jnp.bfloat16 else ref_fp

    # Tight checks vs. references with matching kernel numerics; loose check
    # vs. the pure-f32 module math.
    assert jnp.allclose(y, ref_default, atol=2e-3, rtol=2e-3)
    assert jnp.allclose(y_bf, ref_bf, atol=2e-3, rtol=2e-3)
    assert jnp.allclose(y_f32, ref_fp, atol=2e-3, rtol=2e-3)
    assert jnp.allclose(y, ref_module, atol=5e-2, rtol=5e-2)

    print("KERNEL_OK")
</pallas_src>

<mosaic_0001>
module attributes {stable_mosaic.version = 11 : i64} {
  func.func @_mulutc_kernel(%arg0: i32, %arg1: memref<3x256xbf16, #tpu.memory_space<vmem>>, %arg2: memref<64x3xbf16, #tpu.memory_space<vmem>>, %arg3: memref<64x1xf32, #tpu.memory_space<vmem>>, %arg4: memref<64x64xbf16, #tpu.memory_space<vmem>>, %arg5: memref<64x1xf32, #tpu.memory_space<vmem>>, %arg6: memref<64x128xbf16, #tpu.memory_space<vmem>>, %arg7: memref<64x1xf32, #tpu.memory_space<vmem>>, %arg8: memref<64x192xbf16, #tpu.memory_space<vmem>>, %arg9: memref<64x1xf32, #tpu.memory_space<vmem>>, %arg10: memref<67x256xbf16, #tpu.memory_space<vmem>>, %arg11: memref<64x1xf32, #tpu.memory_space<vmem>>, %arg12: memref<3x64xbf16, #tpu.memory_space<vmem>>, %arg13: memref<3x1xf32, #tpu.memory_space<vmem>>, %arg14: memref<3x256xf32, #tpu.memory_space<vmem>>, %arg15: memref<256x256xbf16, #tpu.memory_space<vmem>>) attributes {dimension_semantics = [#tpu.dimension_semantics<parallel>], iteration_bounds = array<i64: 2>, scalar_prefetch = 0 : i64, scratch_operands = 1 : i64, tpu.core_type = #tpu.core_type<tc>, window_params = [{transform_indices = @transform_0, window_bounds = array<i64: 3, 256>}, {pipeline_mode = #tpu.pipeline_mode<synchronous>, transform_indices = @transform_1, window_bounds = array<i64: 64, 3>}, {pipeline_mode = #tpu.pipeline_mode<synchronous>, transform_indices = @transform_2, window_bounds = array<i64: 64, 1>}, {pipeline_mode = #tpu.pipeline_mode<synchronous>, transform_indices = @transform_3, window_bounds = array<i64: 64, 64>}, {pipeline_mode = #tpu.pipeline_mode<synchronous>, transform_indices = @transform_4, window_bounds = array<i64: 64, 1>}, {pipeline_mode = #tpu.pipeline_mode<synchronous>, transform_indices = @transform_5, window_bounds = array<i64: 64, 128>}, {pipeline_mode = #tpu.pipeline_mode<synchronous>, transform_indices = @transform_6, window_bounds = array<i64: 64, 1>}, {pipeline_mode = #tpu.pipeline_mode<synchronous>, transform_indices = @transform_7, window_bounds = array<i64: 64, 192>}, {pipeline_mode = #tpu.pipeline_mode<synchronous>, transform_indices = @transform_8, window_bounds = array<i64: 64, 1>}, {pipeline_mode = #tpu.pipeline_mode<synchronous>, transform_indices = @transform_9, window_bounds = array<i64: 67, 256>}, {pipeline_mode = #tpu.pipeline_mode<synchronous>, transform_indices = @transform_10, window_bounds = array<i64: 64, 1>}, {pipeline_mode = #tpu.pipeline_mode<synchronous>, transform_indices = @transform_11, window_bounds = array<i64: 3, 64>}, {pipeline_mode = #tpu.pipeline_mode<synchronous>, transform_indices = @transform_12, window_bounds = array<i64: 3, 1>}, {transform_indices = @transform_13, window_bounds = array<i64: 3, 256>}]} {
    %c0 = arith.constant 0 : index
    %c0_0 = arith.constant 0 : index
    %0 = vector.load %arg1[%c0, %c0_0] : memref<3x256xbf16, #tpu.memory_space<vmem>>, vector<3x256xbf16>
    %c0_1 = arith.constant 0 : index
    %c0_2 = arith.constant 0 : index
    %1 = vector.load %arg2[%c0_1, %c0_2] : memref<64x3xbf16, #tpu.memory_space<vmem>>, vector<64x3xbf16>
    %cst = arith.constant dense<0.000000e+00> : vector<64x256xf32>
    %2 = tpu.matmul %1, %0, %cst {dimension_numbers = #tpu.dot_dimension_numbers<[1], [0], [0], [1], [0, 0, 1, 1], [], []>} : vector<64x3xbf16>, vector<3x256xbf16>, vector<64x256xf32> -> vector<64x256xf32>
    %c0_3 = arith.constant 0 : index
    %c0_4 = arith.constant 0 : index
    %3 = vector.load %arg3[%c0_3, %c0_4] : memref<64x1xf32, #tpu.memory_space<vmem>>, vector<64x1xf32>
    %4 = vector.broadcast %3 : vector<64x1xf32> to vector<64x256xf32>
    %5 = arith.addf %2, %4 : vector<64x256xf32>
    %cst_5 = arith.constant 0.000000e+00 : f32
    %6 = vector.broadcast %cst_5 : f32 to vector<64x256xf32>
    %7 = arith.maximumf %5, %6 : vector<64x256xf32>
    %8 = arith.truncf %7 : vector<64x256xf32> to vector<64x256xbf16>
    %c0_6 = arith.constant 0 : index
    %c0_7 = arith.constant 0 : index
    %9 = vector.load %arg15[%c0_6, %c0_7] : memref<256x256xbf16, #tpu.memory_space<vmem>>, vector<64x256xbf16>
    tpu.vector_store %arg15[%c0_6, %c0_7], %8 {strides = array<i32>} : memref<256x256xbf16, #tpu.memory_space<vmem>>, vector<64x256xbf16>,
    %c0_8 = arith.constant 0 : index
    %c0_9 = arith.constant 0 : index
    %10 = vector.load %arg15[%c0_8, %c0_9] : memref<256x256xbf16, #tpu.memory_space<vmem>>, vector<64x256xbf16>
    %c0_10 = arith.constant 0 : index
    %c0_11 = arith.constant 0 : index
    %11 = vector.load %arg4[%c0_10, %c0_11] : memref<64x64xbf16, #tpu.memory_space<vmem>>, vector<64x64xbf16>
    %cst_12 = arith.constant dense<0.000000e+00> : vector<64x256xf32>
    %12 = tpu.matmul %11, %10, %cst_12 {dimension_numbers = #tpu.dot_dimension_numbers<[1], [0], [0], [1], [0, 0, 1, 1], [], []>} : vector<64x64xbf16>, vector<64x256xbf16>, vector<64x256xf32> -> vector<64x256xf32>
    %c0_13 = arith.constant 0 : index
    %c0_14 = arith.constant 0 : index
    %13 = vector.load %arg5[%c0_13, %c0_14] : memref<64x1xf32, #tpu.memory_space<vmem>>, vector<64x1xf32>
    %14 = vector.broadcast %13 : vector<64x1xf32> to vector<64x256xf32>
    %15 = arith.addf %12, %14 : vector<64x256xf32>
    %cst_15 = arith.constant 0.000000e+00 : f32
    %16 = vector.broadcast %cst_15 : f32 to vector<64x256xf32>
    %17 = arith.maximumf %15, %16 : vector<64x256xf32>
    %18 = arith.truncf %17 : vector<64x256xf32> to vector<64x256xbf16>
    %c64 = arith.constant 64 : index
    %c0_16 = arith.constant 0 : index
    %19 = vector.load %arg15[%c64, %c0_16] : memref<256x256xbf16, #tpu.memory_space<vmem>>, vector<64x256xbf16>
    tpu.vector_store %arg15[%c64, %c0_16], %18 {strides = array<i32>} : memref<256x256xbf16, #tpu.memory_space<vmem>>, vector<64x256xbf16>,
    %c0_17 = arith.constant 0 : index
    %c0_18 = arith.constant 0 : index
    %20 = vector.load %arg15[%c0_17, %c0_18] : memref<256x256xbf16, #tpu.memory_space<vmem>>, vector<128x256xbf16>
    %c0_19 = arith.constant 0 : index
    %c0_20 = arith.constant 0 : index
    %21 = vector.load %arg6[%c0_19, %c0_20] : memref<64x128xbf16, #tpu.memory_space<vmem>>, vector<64x128xbf16>
    %cst_21 = arith.constant dense<0.000000e+00> : vector<64x256xf32>
    %22 = tpu.matmul %21, %20, %cst_21 {dimension_numbers = #tpu.dot_dimension_numbers<[1], [0], [0], [1], [0, 0, 1, 1], [], []>} : vector<64x128xbf16>, vector<128x256xbf16>, vector<64x256xf32> -> vector<64x256xf32>
    %c0_22 = arith.constant 0 : index
    %c0_23 = arith.constant 0 : index
    %23 = vector.load %arg7[%c0_22, %c0_23] : memref<64x1xf32, #tpu.memory_space<vmem>>, vector<64x1xf32>
    %24 = vector.broadcast %23 : vector<64x1xf32> to vector<64x256xf32>
    %25 = arith.addf %22, %24 : vector<64x256xf32>
    %cst_24 = arith.constant 0.000000e+00 : f32
    %26 = vector.broadcast %cst_24 : f32 to vector<64x256xf32>
    %27 = arith.maximumf %25, %26 : vector<64x256xf32>
    %28 = arith.truncf %27 : vector<64x256xf32> to vector<64x256xbf16>
    %c128 = arith.constant 128 : index
    %c0_25 = arith.constant 0 : index
    %29 = vector.load %arg15[%c128, %c0_25] : memref<256x256xbf16, #tpu.memory_space<vmem>>, vector<64x256xbf16>
    tpu.vector_store %arg15[%c128, %c0_25], %28 {strides = array<i32>} : memref<256x256xbf16, #tpu.memory_space<vmem>>, vector<64x256xbf16>,
    %c0_26 = arith.constant 0 : index
    %c0_27 = arith.constant 0 : index
    %30 = vector.load %arg15[%c0_26, %c0_27] : memref<256x256xbf16, #tpu.memory_space<vmem>>, vector<192x256xbf16>
    %c0_28 = arith.constant 0 : index
    %c0_29 = arith.constant 0 : index
    %31 = vector.load %arg8[%c0_28, %c0_29] : memref<64x192xbf16, #tpu.memory_space<vmem>>, vector<64x192xbf16>
    %cst_30 = arith.constant dense<0.000000e+00> : vector<64x256xf32>
    %32 = tpu.matmul %31, %30, %cst_30 {dimension_numbers = #tpu.dot_dimension_numbers<[1], [0], [0], [1], [0, 0, 1, 1], [], []>} : vector<64x192xbf16>, vector<192x256xbf16>, vector<64x256xf32> -> vector<64x256xf32>
    %c0_31 = arith.constant 0 : index
    %c0_32 = arith.constant 0 : index
    %33 = vector.load %arg9[%c0_31, %c0_32] : memref<64x1xf32, #tpu.memory_space<vmem>>, vector<64x1xf32>
    %34 = vector.broadcast %33 : vector<64x1xf32> to vector<64x256xf32>
    %35 = arith.addf %32, %34 : vector<64x256xf32>
    %cst_33 = arith.constant 0.000000e+00 : f32
    %36 = vector.broadcast %cst_33 : f32 to vector<64x256xf32>
    %37 = arith.maximumf %35, %36 : vector<64x256xf32>
    %38 = arith.truncf %37 : vector<64x256xf32> to vector<64x256xbf16>
    %c192 = arith.constant 192 : index
    %c0_34 = arith.constant 0 : index
    %39 = vector.load %arg15[%c192, %c0_34] : memref<256x256xbf16, #tpu.memory_space<vmem>>, vector<64x256xbf16>
    tpu.vector_store %arg15[%c192, %c0_34], %38 {strides = array<i32>} : memref<256x256xbf16, #tpu.memory_space<vmem>>, vector<64x256xbf16>,
    %c0_35 = arith.constant 0 : index
    %c0_36 = arith.constant 0 : index
    %40 = vector.load %arg15[%c0_35, %c0_36] : memref<256x256xbf16, #tpu.memory_space<vmem>>, vector<256x256xbf16>
    %c0_37 = arith.constant 0 : index
    %c0_38 = arith.constant 0 : index
    %41 = vector.load %arg10[%c0_37, %c0_38] : memref<67x256xbf16, #tpu.memory_space<vmem>>, vector<67x256xbf16>
    %cst_39 = arith.constant dense<0.000000e+00> : vector<67x256xf32>
    %42 = tpu.matmul %41, %40, %cst_39 {dimension_numbers = #tpu.dot_dimension_numbers<[1], [0], [0], [1], [0, 0, 1, 1], [], []>} : vector<67x256xbf16>, vector<256x256xbf16>, vector<67x256xf32> -> vector<67x256xf32>
    %43 = vector.extract_strided_slice %42 {offsets = [0, 0], sizes = [64, 256], strides = [1, 1]} : vector<67x256xf32> to vector<64x256xf32>
    %c0_40 = arith.constant 0 : index
    %c0_41 = arith.constant 0 : index
    %44 = vector.load %arg11[%c0_40, %c0_41] : memref<64x1xf32, #tpu.memory_space<vmem>>, vector<64x1xf32>
    %45 = vector.broadcast %44 : vector<64x1xf32> to vector<64x256xf32>
    %46 = arith.addf %43, %45 : vector<64x256xf32>
    %cst_42 = arith.constant 0.000000e+00 : f32
    %47 = vector.broadcast %cst_42 : f32 to vector<64x256xf32>
    %48 = arith.maximumf %46, %47 : vector<64x256xf32>
    %49 = arith.truncf %48 : vector<64x256xf32> to vector<64x256xbf16>
    %50 = vector.extract_strided_slice %42 {offsets = [64, 0], sizes = [3, 256], strides = [1, 1]} : vector<67x256xf32> to vector<3x256xf32>
    %c0_43 = arith.constant 0 : index
    %c0_44 = arith.constant 0 : index
    %51 = vector.load %arg12[%c0_43, %c0_44] : memref<3x64xbf16, #tpu.memory_space<vmem>>, vector<3x64xbf16>
    %cst_45 = arith.constant dense<0.000000e+00> : vector<3x256xf32>
    %52 = tpu.matmul %51, %49, %cst_45 {dimension_numbers = #tpu.dot_dimension_numbers<[1], [0], [0], [1], [0, 0, 1, 1], [], []>} : vector<3x64xbf16>, vector<64x256xbf16>, vector<3x256xf32> -> vector<3x256xf32>
    %53 = arith.addf %50, %52 : vector<3x256xf32>
    %c0_46 = arith.constant 0 : index
    %c0_47 = arith.constant 0 : index
    %54 = vector.load %arg13[%c0_46, %c0_47] : memref<3x1xf32, #tpu.memory_space<vmem>>, vector<3x1xf32>
    %55 = vector.broadcast %54 : vector<3x1xf32> to vector<3x256xf32>
    %56 = arith.addf %53, %55 : vector<3x256xf32>
    %57 = math.tanh %56 : vector<3x256xf32>
    %c0_48 = arith.constant 0 : index
    %c0_49 = arith.constant 0 : index
    %58 = vector.load %arg14[%c0_48, %c0_49] : memref<3x256xf32, #tpu.memory_space<vmem>>, vector<3x256xf32>
    tpu.vector_store %arg14[%c0_48, %c0_49], %57 {strides = array<i32>} : memref<3x256xf32, #tpu.memory_space<vmem>>, vector<3x256xf32>,
    return
  }
  func.func @transform_0(%arg0: i32) -> (i32, i32) {
    %c0_i32 = arith.constant 0 : i32
    %c0_i32_0 = arith.constant 0 : i32
    return %c0_i32, %arg0 : i32, i32
  }
  func.func @transform_1(%arg0: i32) -> (i32, i32) {
    %c0_i32 = arith.constant 0 : i32
    %c0_i32_0 = arith.constant 0 : i32
    %c0_i32_1 = arith.constant 0 : i32
    return %c0_i32, %c0_i32_0 : i32, i32
  }
  func.func @transform_2(%arg0: i32) -> (i32, i32) {
    %c0_i32 = arith.constant 0 : i32
    %c0_i32_0 = arith.constant 0 : i32
    %c0_i32_1 = arith.constant 0 : i32
    return %c0_i32, %c0_i32_0 : i32, i32
  }
  func.func @transform_3(%arg0: i32) -> (i32, i32) {
    %c0_i32 = arith.constant 0 : i32
    %c0_i32_0 = arith.constant 0 : i32
    %c0_i32_1 = arith.constant 0 : i32
    return %c0_i32, %c0_i32_0 : i32, i32
  }
  func.func @transform_4(%arg0: i32) -> (i32, i32) {
    %c0_i32 = arith.constant 0 : i32
    %c0_i32_0 = arith.constant 0 : i32
    %c0_i32_1 = arith.constant 0 : i32
    return %c0_i32, %c0_i32_0 : i32, i32
  }
  func.func @transform_5(%arg0: i32) -> (i32, i32) {
    %c0_i32 = arith.constant 0 : i32
    %c0_i32_0 = arith.constant 0 : i32
    %c0_i32_1 = arith.constant 0 : i32
    return %c0_i32, %c0_i32_0 : i32, i32
  }
  func.func @transform_6(%arg0: i32) -> (i32, i32) {
    %c0_i32 = arith.constant 0 : i32
    %c0_i32_0 = arith.constant 0 : i32
    %c0_i32_1 = arith.constant 0 : i32
    return %c0_i32, %c0_i32_0 : i32, i32
  }
  func.func @transform_7(%arg0: i32) -> (i32, i32) {
    %c0_i32 = arith.constant 0 : i32
    %c0_i32_0 = arith.constant 0 : i32
    %c0_i32_1 = arith.constant 0 : i32
    return %c0_i32, %c0_i32_0 : i32, i32
  }
  func.func @transform_8(%arg0: i32) -> (i32, i32) {
    %c0_i32 = arith.constant 0 : i32
    %c0_i32_0 = arith.constant 0 : i32
    %c0_i32_1 = arith.constant 0 : i32
    return %c0_i32, %c0_i32_0 : i32, i32
  }
  func.func @transform_9(%arg0: i32) -> (i32, i32) {
    %c0_i32 = arith.constant 0 : i32
    %c0_i32_0 = arith.constant 0 : i32
    %c0_i32_1 = arith.constant 0 : i32
    return %c0_i32, %c0_i32_0 : i32, i32
  }
  func.func @transform_10(%arg0: i32) -> (i32, i32) {
    %c0_i32 = arith.constant 0 : i32
    %c0_i32_0 = arith.constant 0 : i32
    %c0_i32_1 = arith.constant 0 : i32
    return %c0_i32, %c0_i32_0 : i32, i32
  }
  func.func @transform_11(%arg0: i32) -> (i32, i32) {
    %c0_i32 = arith.constant 0 : i32
    %c0_i32_0 = arith.constant 0 : i32
    %c0_i32_1 = arith.constant 0 : i32
    return %c0_i32, %c0_i32_0 : i32, i32
  }
  func.func @transform_12(%arg0: i32) -> (i32, i32) {
    %c0_i32 = arith.constant 0 : i32
    %c0_i32_0 = arith.constant 0 : i32
    %c0_i32_1 = arith.constant 0 : i32
    return %c0_i32, %c0_i32_0 : i32, i32
  }
  func.func @transform_13(%arg0: i32) -> (i32, i32) {
    %c0_i32 = arith.constant 0 : i32
    %c0_i32_0 = arith.constant 0 : i32
    return %c0_i32, %arg0 : i32, i32
  }
}

</mosaic_0001>

<llo_original>
// kernel: _mulutc_forward_impl.1
$region0: #{_mulutc_forward_impl.1}
  #allocation0 [shape = 'u32[]', space=smem, size = 0x4, offset = 0x4, fixed_abs, tag = 'smem constant byte address 0x4 - core index']
  #allocation1 [shape = 'u32[72,128]{1,0:T(1,128)}', space=vmem, size = 0x9000, scoped, tag = 'internal scratch']
  #allocation2 [shape = 'bf16[256,256]{1,0:T(8,128)(2,1)}', space=vmem, size = 0x20000, scoped, tag = 'scratch operand']
  %s0 = inlined_call_operand.vmem [shape: bf16[3,512], index: 0, kind: input, shape index: {}]
  %s1 = inlined_call_operand.vmem [shape: bf16[64,3], index: 1, kind: input, shape index: {}]
  %s2 = inlined_call_operand.vmem [shape: f32[64,1], index: 2, kind: input, shape index: {}]
  %s3 = inlined_call_operand.vmem [shape: bf16[64,64], index: 3, kind: input, shape index: {}]
  %s4 = inlined_call_operand.vmem [shape: f32[64,1], index: 4, kind: input, shape index: {}]
  %s5 = inlined_call_operand.vmem [shape: bf16[64,128], index: 5, kind: input, shape index: {}]
  %s6 = inlined_call_operand.vmem [shape: f32[64,1], index: 6, kind: input, shape index: {}]
  %s7 = inlined_call_operand.vmem [shape: bf16[64,192], index: 7, kind: input, shape index: {}]
  %s8 = inlined_call_operand.vmem [shape: f32[64,1], index: 8, kind: input, shape index: {}]
  %s9 = inlined_call_operand.vmem [shape: bf16[67,256], index: 9, kind: input, shape index: {}]
  %s10 = inlined_call_operand.vmem [shape: f32[64,1], index: 10, kind: input, shape index: {}]
  %s11 = inlined_call_operand.vmem [shape: bf16[3,64], index: 11, kind: input, shape index: {}]
  %s12 = inlined_call_operand.vmem [shape: f32[3,1], index: 12, kind: input, shape index: {}]
  %s13 = inlined_call_operand.vmem [shape: f32[3,512], index: 13, kind: output, shape index: {}]
  %s14 = sld [smem:[#allocation0]]
  $region85: #{_mulutc_forward_impl.1} parent=0
    _
  %s16 = ssub.s32 1, %s14
  %s17 = scalar_select 0, %s16, %s14
  loop: start=0, step=1, limit=4
  $region2: #{_mulutc_forward_impl.1} parent=0 // loop_pre_header
    _
  $region3: #{_mulutc_forward_impl.1} parent=0 // loop_header
    %s19 = sphi 0, %s23
    %p20 = scmp.ge.s32.totalorder %s19, 4
    %s29 = sphi 0, %s31
    %s32 = sphi 0, %s29
    %s33 = sphi 0, %s32
    %s49 = sphi 0, %s33
    %s53 = sphi 0, %s53
    %s55 = sphi 0, %s53
    %s56 = sphi 0, %s55
    %s70 = sphi 0, %s56
    %s74 = sphi 0, %s74
    %s76 = sphi 0, %s74
    %s77 = sphi 0, %s76
    %s91 = sphi 0, %s77
    %s95 = sphi 0, %s95
    %s97 = sphi 0, %s95
    %s98 = sphi 0, %s97
    %s112 = sphi 0, %s98
    %s116 = sphi 0, %s116
    %s118 = sphi 0, %s116
    %s119 = sphi 0, %s118
    %s133 = sphi 0, %s119
    %s137 = sphi 0, %s137
    %s139 = sphi 0, %s137
    %s140 = sphi 0, %s139
    %s154 = sphi 0, %s140
    %s158 = sphi 0, %s158
    %s160 = sphi 0, %s158
    %s161 = sphi 0, %s160
    %s175 = sphi 0, %s161
    %s179 = sphi 0, %s179
    %s181 = sphi 0, %s179
    %s182 = sphi 0, %s181
    %s196 = sphi 0, %s182
    %s200 = sphi 0, %s200
    %s202 = sphi 0, %s200
    %s203 = sphi 0, %s202
    %s217 = sphi 0, %s203
    %s221 = sphi 0, %s221
    %s223 = sphi 0, %s221
    %s224 = sphi 0, %s223
    %s238 = sphi 0, %s224
    %s242 = sphi 0, %s242
    %s244 = sphi 0, %s242
    %s245 = sphi 0, %s244
    %s259 = sphi 0, %s245
    %s263 = sphi 0, %s263
    %s265 = sphi 0, %s263
    %s266 = sphi 0, %s265
    %s280 = sphi 0, %s266
    %s284 = sphi 0, %s284
    %s286 = sphi 0, %s284
    %s287 = sphi 0, %s286
    %s301 = sphi 0, %s287
    %s307 = sphi 0, %s309
    %s310 = sphi 0, %s307
    %s311 = sphi 0, %s310
    %s327 = sphi 0, %s311
  $region4: #{_mulutc_forward_impl.1} parent=0 // loop_header_branch
    %22 = sbr.rel (%p20) target = $region8
  $region5: #{_mulutc_forward_impl.1} parent=0 // loop_body
    %s24 = ssub.s32 %s19, 1
    %s25 = ssub.s32 %s19, 2
    %s26 = sadd.s32 %s19, 1
    %s27 = ssub.s32 %s19, %s26
    %p28 = scmp.eq.s32.totalorder %s27, 0
    %s30 = sadd.s32 %s29, 1
    %s31 = scalar_select %p28, %s29, %s30
    %p34 = pneg %p28
    %p35 = scmp.eq.s32.totalorder %s19, 1
    %p36 = por %p34, %p35
    %p37 = scmp.ne.s32.totalorder %s29, %s32
    %p38 = scmp.eq.s32.totalorder %s19, 0
    %p39 = por %p37, %p38
    %p40 = scmp.ne.s32.totalorder %s29, %s32
    %p41 = scmp.eq.s32.totalorder %s24, 1
    %p42 = por %p40, %p41
    %p43 = scmp.ne.s32.totalorder %s32, %s33
    %p44 = scmp.eq.s32.totalorder %s24, 0
    %p45 = por %p43, %p44
    %p46 = scmp.ne.s32.totalorder %s32, %s33
    %p47 = scmp.eq.s32.totalorder %s25, 1
    %p48 = por %p46, %p47
    %p50 = scmp.ne.s32.totalorder %s33, %s49
    %p51 = scmp.eq.s32.totalorder %s25, 0
    %p52 = por %p50, %p51
    %s54 = sadd.s32 %s53, 1
    %p57 = scmp.eq.s32.totalorder %s19, 1
    %p58 = scmp.ne.s32.totalorder %s53, %s55
    %p59 = scmp.eq.s32.totalorder %s19, 0
    %p60 = por %p58, %p59
    %p61 = scmp.ne.s32.totalorder %s53, %s55
    %p62 = scmp.eq.s32.totalorder %s24, 1
    %p63 = por %p61, %p62
    %p64 = scmp.ne.s32.totalorder %s55, %s56
    %p65 = scmp.eq.s32.totalorder %s24, 0
    %p66 = por %p64, %p65
    %p67 = scmp.ne.s32.totalorder %s55, %s56
    %p68 = scmp.eq.s32.totalorder %s25, 1
    %p69 = por %p67, %p68
    %p71 = scmp.ne.s32.totalorder %s56, %s70
    %p72 = scmp.eq.s32.totalorder %s25, 0
    %p73 = por %p71, %p72
    %s75 = sadd.s32 %s74, 1
    %p78 = scmp.eq.s32.totalorder %s19, 1
    %p79 = scmp.ne.s32.totalorder %s74, %s76
    %p80 = scmp.eq.s32.totalorder %s19, 0
    %p81 = por %p79, %p80
    %p82 = scmp.ne.s32.totalorder %s74, %s76
    %p83 = scmp.eq.s32.totalorder %s24, 1
    %p84 = por %p82, %p83
    %p85 = scmp.ne.s32.totalorder %s76, %s77
    %p86 = scmp.eq.s32.totalorder %s24, 0
    %p87 = por %p85, %p86
    %p88 = scmp.ne.s32.totalorder %s76, %s77
    %p89 = scmp.eq.s32.totalorder %s25, 1
    %p90 = por %p88, %p89
    %p92 = scmp.ne.s32.totalorder %s77, %s91
    %p93 = scmp.eq.s32.totalorder %s25, 0
    %p94 = por %p92, %p93
    %s96 = sadd.s32 %s95, 1
    %p99 = scmp.eq.s32.totalorder %s19, 1
    %p100 = scmp.ne.s32.totalorder %s95, %s97
    %p101 = scmp.eq.s32.totalorder %s19, 0
    %p102 = por %p100, %p101
    %p103 = scmp.ne.s32.totalorder %s95, %s97
    %p104 = scmp.eq.s32.totalorder %s24, 1
    %p105 = por %p103, %p104
    %p106 = scmp.ne.s32.totalorder %s97, %s98
    %p107 = scmp.eq.s32.totalorder %s24, 0
    %p108 = por %p106, %p107
    %p109 = scmp.ne.s32.totalorder %s97, %s98
    %p110 = scmp.eq.s32.totalorder %s25, 1
    %p111 = por %p109, %p110
    %p113 = scmp.ne.s32.totalorder %s98, %s112
    %p114 = scmp.eq.s32.totalorder %s25, 0
    %p115 = por %p113, %p114
    %s117 = sadd.s32 %s116, 1
    %p120 = scmp.eq.s32.totalorder %s19, 1
    %p121 = scmp.ne.s32.totalorder %s116, %s118
    %p122 = scmp.eq.s32.totalorder %s19, 0
    %p123 = por %p121, %p122
    %p124 = scmp.ne.s32.totalorder %s116, %s118
    %p125 = scmp.eq.s32.totalorder %s24, 1
    %p126 = por %p124, %p125
    %p127 = scmp.ne.s32.totalorder %s118, %s119
    %p128 = scmp.eq.s32.totalorder %s24, 0
    %p129 = por %p127, %p128
    %p130 = scmp.ne.s32.totalorder %s118, %s119
    %p131 = scmp.eq.s32.totalorder %s25, 1
    %p132 = por %p130, %p131
    %p134 = scmp.ne.s32.totalorder %s119, %s133
    %p135 = scmp.eq.s32.totalorder %s25, 0
    %p136 = por %p134, %p135
    %s138 = sadd.s32 %s137, 1
    %p141 = scmp.eq.s32.totalorder %s19, 1
    %p142 = scmp.ne.s32.totalorder %s137, %s139
    %p143 = scmp.eq.s32.totalorder %s19, 0
    %p144 = por %p142, %p143
    %p145 = scmp.ne.s32.totalorder %s137, %s139
    %p146 = scmp.eq.s32.totalorder %s24, 1
    %p147 = por %p145, %p146
    %p148 = scmp.ne.s32.totalorder %s139, %s140
    %p149 = scmp.eq.s32.totalorder %s24, 0
    %p150 = por %p148, %p149
    %p151 = scmp.ne.s32.totalorder %s139, %s140
    %p152 = scmp.eq.s32.totalorder %s25, 1
    %p153 = por %p151, %p152
    %p155 = scmp.ne.s32.totalorder %s140, %s154
    %p156 = scmp.eq.s32.totalorder %s25, 0
    %p157 = por %p155, %p156
    %s159 = sadd.s32 %s158, 1
    %p162 = scmp.eq.s32.totalorder %s19, 1
    %p163 = scmp.ne.s32.totalorder %s158, %s160
    %p164 = scmp.eq.s32.totalorder %s19, 0
    %p165 = por %p163, %p164
    %p166 = scmp.ne.s32.totalorder %s158, %s160
    %p167 = scmp.eq.s32.totalorder %s24, 1
    %p168 = por %p166, %p167
    %p169 = scmp.ne.s32.totalorder %s160, %s161
    %p170 = scmp.eq.s32.totalorder %s24, 0
    %p171 = por %p169, %p170
    %p172 = scmp.ne.s32.totalorder %s160, %s161
    %p173 = scmp.eq.s32.totalorder %s25, 1
    %p174 = por %p172, %p173
    %p176 = scmp.ne.s32.totalorder %s161, %s175
    %p177 = scmp.eq.s32.totalorder %s25, 0
    %p178 = por %p176, %p177
    %s180 = sadd.s32 %s179, 1
    %p183 = scmp.eq.s32.totalorder %s19, 1
    %p184 = scmp.ne.s32.totalorder %s179, %s181
    %p185 = scmp.eq.s32.totalorder %s19, 0
    %p186 = por %p184, %p185
    %p187 = scmp.ne.s32.totalorder %s179, %s181
    %p188 = scmp.eq.s32.totalorder %s24, 1
    %p189 = por %p187, %p188
    %p190 = scmp.ne.s32.totalorder %s181, %s182
    %p191 = scmp.eq.s32.totalorder %s24, 0
    %p192 = por %p190, %p191
    %p193 = scmp.ne.s32.totalorder %s181, %s182
    %p194 = scmp.eq.s32.totalorder %s25, 1
    %p195 = por %p193, %p194
    %p197 = scmp.ne.s32.totalorder %s182, %s196
    %p198 = scmp.eq.s32.totalorder %s25, 0
    %p199 = por %p197, %p198
    %s201 = sadd.s32 %s200, 1
    %p204 = scmp.eq.s32.totalorder %s19, 1
    %p205 = scmp.ne.s32.totalorder %s200, %s202
    %p206 = scmp.eq.s32.totalorder %s19, 0
    %p207 = por %p205, %p206
    %p208 = scmp.ne.s32.totalorder %s200, %s202
    %p209 = scmp.eq.s32.totalorder %s24, 1
    %p210 = por %p208, %p209
    %p211 = scmp.ne.s32.totalorder %s202, %s203
    %p212 = scmp.eq.s32.totalorder %s24, 0
    %p213 = por %p211, %p212
    %p214 = scmp.ne.s32.totalorder %s202, %s203
    %p215 = scmp.eq.s32.totalorder %s25, 1
    %p216 = por %p214, %p215
    %p218 = scmp.ne.s32.totalorder %s203, %s217
    %p219 = scmp.eq.s32.totalorder %s25, 0
    %p220 = por %p218, %p219
    %s222 = sadd.s32 %s221, 1
    %p225 = scmp.eq.s32.totalorder %s19, 1
    %p226 = scmp.ne.s32.totalorder %s221, %s223
    %p227 = scmp.eq.s32.totalorder %s19, 0
    %p228 = por %p226, %p227
    %p229 = scmp.ne.s32.totalorder %s221, %s223
    %p230 = scmp.eq.s32.totalorder %s24, 1
    %p231 = por %p229, %p230
    %p232 = scmp.ne.s32.totalorder %s223, %s224
    %p233 = scmp.eq.s32.totalorder %s24, 0
    %p234 = por %p232, %p233
    %p235 = scmp.ne.s32.totalorder %s223, %s224
    %p236 = scmp.eq.s32.totalorder %s25, 1
    %p237 = por %p235, %p236
    %p239 = scmp.ne.s32.totalorder %s224, %s238
    %p240 = scmp.eq.s32.totalorder %s25, 0
    %p241 = por %p239, %p240
    %s243 = sadd.s32 %s242, 1
    %p246 = scmp.eq.s32.totalorder %s19, 1
    %p247 = scmp.ne.s32.totalorder %s242, %s244
    %p248 = scmp.eq.s32.totalorder %s19, 0
    %p249 = por %p247, %p248
    %p250 = scmp.ne.s32.totalorder %s242, %s244
    %p251 = scmp.eq.s32.totalorder %s24, 1
    %p252 = por %p250, %p251
    %p253 = scmp.ne.s32.totalorder %s244, %s245
    %p254 = scmp.eq.s32.totalorder %s24, 0
    %p255 = por %p253, %p254
    %p256 = scmp.ne.s32.totalorder %s244, %s245
    %p257 = scmp.eq.s32.totalorder %s25, 1
    %p258 = por %p256, %p257
    %p260 = scmp.ne.s32.totalorder %s245, %s259
    %p261 = scmp.eq.s32.totalorder %s25, 0
    %p262 = por %p260, %p261
    %s264 = sadd.s32 %s263, 1
    %p267 = scmp.eq.s32.totalorder %s19, 1
    %p268 = scmp.ne.s32.totalorder %s263, %s265
    %p269 = scmp.eq.s32.totalorder %s19, 0
    %p270 = por %p268, %p269
    %p271 = scmp.ne.s32.totalorder %s263, %s265
    %p272 = scmp.eq.s32.totalorder %s24, 1
    %p273 = por %p271, %p272
    %p274 = scmp.ne.s32.totalorder %s265, %s266
    %p275 = scmp.eq.s32.totalorder %s24, 0
    %p276 = por %p274, %p275
    %p277 = scmp.ne.s32.totalorder %s265, %s266
    %p278 = scmp.eq.s32.totalorder %s25, 1
    %p279 = por %p277, %p278
    %p281 = scmp.ne.s32.totalorder %s266, %s280
    %p282 = scmp.eq.s32.totalorder %s25, 0
    %p283 = por %p281, %p282
    %s285 = sadd.s32 %s284, 1
    %p288 = scmp.eq.s32.totalorder %s19, 1
    %p289 = scmp.ne.s32.totalorder %s284, %s286
    %p290 = scmp.eq.s32.totalorder %s19, 0
    %p291 = por %p289, %p290
    %p292 = scmp.ne.s32.totalorder %s284, %s286
    %p293 = scmp.eq.s32.totalorder %s24, 1
    %p294 = por %p292, %p293
    %p295 = scmp.ne.s32.totalorder %s286, %s287
    %p296 = scmp.eq.s32.totalorder %s24, 0
    %p297 = por %p295, %p296
    %p298 = scmp.ne.s32.totalorder %s286, %s287
    %p299 = scmp.eq.s32.totalorder %s25, 1
    %p300 = por %p298, %p299
    %p302 = scmp.ne.s32.totalorder %s287, %s301
    %p303 = scmp.eq.s32.totalorder %s25, 0
    %p304 = por %p302, %p303
    %s305 = ssub.s32 %s19, %s26
    %p306 = scmp.eq.s32.totalorder %s305, 0
    %s308 = sadd.s32 %s307, 1
    %s309 = scalar_select %p306, %s307, %s308
    %p312 = pneg %p306
    %p313 = scmp.eq.s32.totalorder %s19, 1
    %p314 = por %p312, %p313
    %p315 = scmp.ne.s32.totalorder %s307, %s310
    %p316 = scmp.eq.s32.totalorder %s19, 0
    %p317 = por %p315, %p316
    %p318 = scmp.ne.s32.totalorder %s307, %s310
    %p319 = scmp.eq.s32.totalorder %s24, 1
    %p320 = por %p318, %p319
    %p321 = scmp.ne.s32.totalorder %s310, %s311
    %p322 = scmp.eq.s32.totalorder %s24, 0
    %p323 = por %p321, %p322
    %p324 = scmp.ne.s32.totalorder %s310, %s311
    %p325 = scmp.eq.s32.totalorder %s25, 1
    %p326 = por %p324, %p325
    %p328 = scmp.ne.s32.totalorder %s311, %s327
    %p329 = scmp.eq.s32.totalorder %s25, 0
    %p330 = por %p328, %p329
    %p331 = scmp.le.s32.totalorder 1, %s19
    %p332 = scmp.lt.s32.totalorder %s19, 3
    %p333 = pnand %p331, %p332
    %p334 = pneg %p333
    // Predicated region
    $region9: #{_mulutc_forward_impl.1} parent=5 // pred_check
      _
    $region10: #{_mulutc_forward_impl.1} parent=5 // pred_check_branch
      %336 = sbr.rel (%p333) target = $region12
    $region11: #{_mulutc_forward_impl.1} parent=5 // pred_region
      %s337 = ssub.s32 %s19, 1
      // Predicated region
      $region13: #{_mulutc_forward_impl.1} parent=11 // pred_check
        %p338 = pneg %p66
      $region14: #{_mulutc_forward_impl.1} parent=11 // pred_check_branch
        %340 = sbr.rel (%p338) target = $region16
      $region15: #{_mulutc_forward_impl.1} parent=11 // pred_region
        _
      $region16: #{_mulutc_forward_impl.1} parent=11 // pred_fallthru
        _
      // Predicated region
      $region17: #{_mulutc_forward_impl.1} parent=11 // pred_check
        %p341 = pneg %p87
      $region18: #{_mulutc_forward_impl.1} parent=11 // pred_check_branch
        %343 = sbr.rel (%p341) target = $region20
      $region19: #{_mulutc_forward_impl.1} parent=11 // pred_region
        _
      $region20: #{_mulutc_forward_impl.1} parent=11 // pred_fallthru
        _
      // Predicated region
      $region21: #{_mulutc_forward_impl.1} parent=11 // pred_check
        %p344 = pneg %p108
      $region22: #{_mulutc_forward_impl.1} parent=11 // pred_check_branch
        %346 = sbr.rel (%p344) target = $region24
      $region23: #{_mulutc_forward_impl.1} parent=11 // pred_region
        _
      $region24: #{_mulutc_forward_impl.1} parent=11 // pred_fallthru
        _
      // Predicated region
      $region25: #{_mulutc_forward_impl.1} parent=11 // pred_check
        %p347 = pneg %p129
      $region26: #{_mulutc_forward_impl.1} parent=11 // pred_check_branch
        %349 = sbr.rel (%p347) target = $region28
      $region27: #{_mulutc_forward_impl.1} parent=11 // pred_region
        _
      $region28: #{_mulutc_forward_impl.1} parent=11 // pred_fallthru
        _
      // Predicated region
      $region29: #{_mulutc_forward_impl.1} parent=11 // pred_check
        %p350 = pneg %p150
      $region30: #{_mulutc_forward_impl.1} parent=11 // pred_check_branch
        %352 = sbr.rel (%p350) target = $region32
      $region31: #{_mulutc_forward_impl.1} parent=11 // pred_region
        _
      $region32: #{_mulutc_forward_impl.1} parent=11 // pred_fallthru
        _
      // Predicated region
      $region33: #{_mulutc_forward_impl.1} parent=11 // pred_check
        %p353 = pneg %p171
      $region34: #{_mulutc_forward_impl.1} parent=11 // pred_check_branch
        %355 = sbr.rel (%p353) target = $region36
      $region35: #{_mulutc_forward_impl.1} parent=11 // pred_region
        _
      $region36: #{_mulutc_forward_impl.1} parent=11 // pred_fallthru
        _
      // Predicated region
      $region37: #{_mulutc_forward_impl.1} parent=11 // pred_check
        %p356 = pneg %p192
      $region38: #{_mulutc_forward_impl.1} parent=11 // pred_check_branch
        %358 = sbr.rel (%p356) target = $region40
      $region39: #{_mulutc_forward_impl.1} parent=11 // pred_region
        _
      $region40: #{_mulutc_forward_impl.1} parent=11 // pred_fallthru
        _
      // Predicated region
      $region41: #{_mulutc_forward_impl.1} parent=11 // pred_check
        %p359 = pneg %p213
      $region42: #{_mulutc_forward_impl.1} parent=11 // pred_check_branch
        %361 = sbr.rel (%p359) target = $region44
      $region43: #{_mulutc_forward_impl.1} parent=11 // pred_region
        _
      $region44: #{_mulutc_forward_impl.1} parent=11 // pred_fallthru
        _
      // Predicated region
      $region45: #{_mulutc_forward_impl.1} parent=11 // pred_check
        %p362 = pneg %p234
      $region46: #{_mulutc_forward_impl.1} parent=11 // pred_check_branch
        %364 = sbr.rel (%p362) target = $region48
      $region47: #{_mulutc_forward_impl.1} parent=11 // pred_region
        _
      $region48: #{_mulutc_forward_impl.1} parent=11 // pred_fallthru
        _
      // Predicated region
      $region49: #{_mulutc_forward_impl.1} parent=11 // pred_check
        %p365 = pneg %p255
      $region50: #{_mulutc_forward_impl.1} parent=11 // pred_check_branch
        %367 = sbr.rel (%p365) target = $region52
      $region51: #{_mulutc_forward_impl.1} parent=11 // pred_region
        _
      $region52: #{_mulutc_forward_impl.1} parent=11 // pred_fallthru
        _
      // Predicated region
      $region53: #{_mulutc_forward_impl.1} parent=11 // pred_check
        %p368 = pneg %p276
      $region54: #{_mulutc_forward_impl.1} parent=11 // pred_check_branch
        %370 = sbr.rel (%p368) target = $region56
      $region55: #{_mulutc_forward_impl.1} parent=11 // pred_region
        _
      $region56: #{_mulutc_forward_impl.1} parent=11 // pred_fallthru
        _
      // Predicated region
      $region57: #{_mulutc_forward_impl.1} parent=11 // pred_check
        %p371 = pneg %p297
      $region58: #{_mulutc_forward_impl.1} parent=11 // pred_check_branch
        %373 = sbr.rel (%p371) target = $region60
      $region59: #{_mulutc_forward_impl.1} parent=11 // pred_region
        _
      $region60: #{_mulutc_forward_impl.1} parent=11 // pred_fallthru
        _
    $region12: #{_mulutc_forward_impl.1} parent=5 // pred_fallthru
      _
    %p374 = scmp.lt.s32.totalorder %s19, 2
    // Predicated region
    $region61: #{_mulutc_forward_impl.1} parent=5 // pred_check
      %p375 = pneg %p374
    $region62: #{_mulutc_forward_impl.1} parent=5 // pred_check_branch
      %377 = sbr.rel (%p375) target = $region64
    $region63: #{_mulutc_forward_impl.1} parent=5 // pred_region
      // Predicated region
      $region65: #{_mulutc_forward_impl.1} parent=63 // pred_check
        %p378 = pneg %p39
      $region66: #{_mulutc_forward_impl.1} parent=63 // pred_check_branch
        %380 = sbr.rel (%p378) target = $region68
      $region67: #{_mulutc_forward_impl.1} parent=63 // pred_region
        %s381 = smul.u32 2, %s19
        %p382 = scmp.lt.s32.totalorder %s381, 3
        %s383 = scalar_select %p382, %s381, 3
        %s384 = smul.addr %s383, 2
        %s385 = scalar_lea.vmem %s0, %s384
        %s386 = smul.u32 2, %s19
      $region68: #{_mulutc_forward_impl.1} parent=63 // pred_fallthru
        _
    $region64: #{_mulutc_forward_impl.1} parent=5 // pred_fallthru
      _
    %p387 = scmp.le.s32.totalorder 1, %s19
    %p388 = scmp.lt.s32.totalorder %s19, 3
    %p389 = pnand %p387, %p388
    %p390 = pneg %p389
    // Predicated region
    $region69: #{_mulutc_forward_impl.1} parent=5 // pred_check
      _
    $region70: #{_mulutc_forward_impl.1} parent=5 // pred_check_branch
      %392 = sbr.rel (%p389) target = $region72
    $region71: #{_mulutc_forward_impl.1} parent=5 // pred_region
      %s393 = ssub.s32 %s19, 1
      %s394 = smul.u32 2, %s24
      %p395 = scmp.lt.s32.totalorder %s394, 3
      %s396 = scalar_select %p395, %s394, 3
      %s397 = smul.addr %s396, 2
      %s398 = scalar_lea.vmem %s0, %s397
      %p399 = pneg %p45
      %p400 = pneg %p42
      %p401 = pneg %p66
      %p402 = pneg %p63
      %p403 = pneg %p87
      %p404 = pneg %p84
      %p405 = pneg %p108
      %p406 = pneg %p105
      %p407 = pneg %p129
      %p408 = pneg %p126
      %p409 = pneg %p150
      %p410 = pneg %p147
      %p411 = pneg %p171
      %p412 = pneg %p168
      %p413 = pneg %p192
      %p414 = pneg %p189
      %p415 = pneg %p213
      %p416 = pneg %p210
      %p417 = pneg %p234
      %p418 = pneg %p231
      %p419 = pneg %p255
      %p420 = pneg %p252
      %p421 = pneg %p276
      %p422 = pneg %p273
      %p423 = pneg %p297
      %p424 = pneg %p294
      %p425 = pneg %p323
      %p426 = pneg %p320
      %s427 = smul.u32 2, %s24
      %p428 = scmp.lt.s32.totalorder %s427, 3
      %s429 = scalar_select %p428, %s427, 3
      %s430 = smul.addr %s429, 4
      %s431 = scalar_lea.vmem %s13, %s430
      %s432 = smul.u32 2, %s24
      %p433 = scmp.lt.s32.totalorder %s432, 3
      %s434 = scalar_select %p433, %s432, 3
      %s435 = smul.addr %s434, 2
      %s436 = scalar_lea.vmem %s0, %s435
      %s437 = smul.u32 2, %s24
      %s438 = smul.u32 2, %s24
      %p439 = scmp.lt.s32.totalorder %s438, 3
      %s440 = scalar_select %p439, %s438, 3
      %s441 = smul.addr %s440, 4
      %s442 = scalar_lea.vmem %s13, %s441
      %s443 = smul.u32 2, %s24
      %v445 = vld [vmem:[%s436] sm:$0xf]
      %v446 = vld [vmem:[%s1] sm:$0xf]
      %v447 = vld [vmem:[%s1 + $0x4] sm:$0xf]
      %v448 = vld [vmem:[%s1 + $0x8] sm:$0xf]
      %v449 = vld [vmem:[%s1 + $0xc] sm:$0xf]
      %v450 = vld [vmem:[%s1 + $0x10] sm:$0xf]
      %v451 = vld [vmem:[%s1 + $0x14] sm:$0xf]
      %v452 = vld [vmem:[%s1 + $0x18] sm:$0xf]
      %v453 = vld [vmem:[%s1 + $0x1c] sm:$0xf]
      %v454 = vld [vmem:[%s2] sm:$0xff]
      %v455 = vld [vmem:[%s2 + $0x8] sm:$0xff]
      %v456 = vld [vmem:[%s2 + $0x10] sm:$0xff]
      %v457 = vld [vmem:[%s2 + $0x18] sm:$0xff]
      %v458 = vld [vmem:[%s2 + $0x20] sm:$0xff]
      %v459 = vld [vmem:[%s2 + $0x28] sm:$0xff]
      %v460 = vld [vmem:[%s2 + $0x30] sm:$0xff]
      %v461 = vld [vmem:[%s2 + $0x38] sm:$0xff]
      %463 = vset.pattern.permute.xlu0 0
      %464 = vperm.xlu0 %463, %v454
      %v465 = vpop.permute.xlu0 %464
      %468 = vset.pattern.permute.xlu0 0
      %469 = vperm.xlu0 %468, %v455
      %v470 = vpop.permute.xlu0 %469
      %473 = vset.pattern.permute.xlu0 0
      %474 = vperm.xlu0 %473, %v456
      %v475 = vpop.permute.xlu0 %474
      %478 = vset.pattern.permute.xlu0 0
      %479 = vperm.xlu0 %478, %v457
      %v480 = vpop.permute.xlu0 %479
      %483 = vset.pattern.permute.xlu0 0
      %484 = vperm.xlu0 %483, %v458
      %v485 = vpop.permute.xlu0 %484
      %488 = vset.pattern.permute.xlu0 0
      %489 = vperm.xlu0 %488, %v459
      %v490 = vpop.permute.xlu0 %489
      %493 = vset.pattern.permute.xlu0 0
      %494 = vperm.xlu0 %493, %v460
      %v495 = vpop.permute.xlu0 %494
      %498 = vset.pattern.permute.xlu0 0
      %499 = vperm.xlu0 %498, %v461
      %v500 = vpop.permute.xlu0 %499
      %v510 = vunpack.c.l.b16 %v446
      %v511 = vunpack.c.l.b16 %v447
      %v512 = vunpack.c.l.b16 %v448
      %v513 = vunpack.c.l.b16 %v449
      %v514 = vunpack.c.l.b16 %v450
      %v515 = vunpack.c.l.b16 %v451
      %v516 = vunpack.c.l.b16 %v452
      %v517 = vunpack.c.l.b16 %v453
      %v518 = vpack.c.b16 %v511, %v510
      %v519 = vpack.c.b16 %v513, %v512
      %v520 = vpack.c.b16 %v515, %v514
      %v521 = vpack.c.b16 %v517, %v516
      %523 = vst [vmem:[#allocation1] ss:$4 sm:$0xff] %v445
      %v524 = vld.sshfl [vmem:[#allocation1] sm:$0xff pattern:$0x73625140]
      %v525 = vld.sshfl [vmem:[#allocation1 + $0x8] sm:$0xff pattern:$0x73625140]
      %vm526 = vcmask 23552
      %v528 = vsel %vm526, %v518, 0
      %v531 = vsel %vm526, %v519, 0
      %v534 = vsel %vm526, %v520, 0
      %v537 = vsel %vm526, %v521, 0
      %vm539 = vcmask 1040384
      %vm540 = vcmask 1041408
      %v541 = vsel %vm539, 4294967295, 65535
      %v542 = vsel %vm540, %v541, 0
      %v543 = vand.u32 %v524, %v542
      %v545 = vand.u32 %v525, %v542
      %547 = vmatpush.bf16.msra.mxu0 0
      %548 = vmatpush.bf16.msra.mxu0 0
      %549 = vmatpush.bf16.msra.mxu0 0
      %550 = vmatpush.bf16.msra.mxu0 0
      %551 = vmatpush.bf16.msra.mxu0 0
      %552 = vmatpush.bf16.msra.mxu0 0
      %553 = vmatpush.bf16.msra.mxu0 0
      %554 = vmatpush.bf16.msra.mxu0 %v543
      %555 = vmatmul.bf16.gmra.mxu0 %v528
      %v556 = vpop.f32.mrf.mxu0
      %v557 = vadd.f32 %v465, %v556
      %v558 = vpop.f32.mrf.mxu0
      %v559 = vadd.f32 %v470, %v558
      %560 = vmatmul.bf16.gmra.mxu0 %v531
      %v561 = vpop.f32.mrf.mxu0
      %v562 = vadd.f32 %v475, %v561
      %v563 = vpop.f32.mrf.mxu0
      %v564 = vadd.f32 %v480, %v563
      %565 = vmatmul.bf16.gmra.mxu0 %v534
      %v566 = vpop.f32.mrf.mxu0
      %v567 = vadd.f32 %v485, %v566
      %v568 = vpop.f32.mrf.mxu0
      %v569 = vadd.f32 %v490, %v568
      %570 = vmatmul.bf16.gmra.mxu0 %v537
      %v571 = vpop.f32.mrf.mxu0
      %v572 = vadd.f32 %v495, %v571
      %v573 = vpop.f32.mrf.mxu0
      %v574 = vadd.f32 %v500, %v573
      %575 = vdwg.mxu0
      %576 = vmatpush.bf16.msra.mxu0 0
      %577 = vmatpush.bf16.msra.mxu0 0
      %578 = vmatpush.bf16.msra.mxu0 0
      %579 = vmatpush.bf16.msra.mxu0 0
      %580 = vmatpush.bf16.msra.mxu0 0
      %581 = vmatpush.bf16.msra.mxu0 0
      %582 = vmatpush.bf16.msra.mxu0 0
      %583 = vmatpush.bf16.msra.mxu0 %v545
      %584 = vmatmul.bf16.gmra.mxu0 %v528
      %v585 = vpop.f32.mrf.mxu0
      %v586 = vadd.f32 %v465, %v585
      %v587 = vpop.f32.mrf.mxu0
      %v588 = vadd.f32 %v470, %v587
      %589 = vmatmul.bf16.gmra.mxu0 %v531
      %v590 = vpop.f32.mrf.mxu0
      %v591 = vadd.f32 %v475, %v590
      %v592 = vpop.f32.mrf.mxu0
      %v593 = vadd.f32 %v480, %v592
      %594 = vmatmul.bf16.gmra.mxu0 %v534
      %v595 = vpop.f32.mrf.mxu0
      %v596 = vadd.f32 %v485, %v595
      %v597 = vpop.f32.mrf.mxu0
      %v598 = vadd.f32 %v490, %v597
      %599 = vmatmul.bf16.gmra.mxu0 %v537
      %v600 = vpop.f32.mrf.mxu0
      %v601 = vadd.f32 %v495, %v600
      %v602 = vpop.f32.mrf.mxu0
      %v603 = vadd.f32 %v500, %v602
      %604 = vdwg.mxu0
      %v605 = vmax.f32 %v557, 0.0
      %v606 = vmax.f32 %v586, 0.0
      %v607 = vmax.f32 %v559, 0.0
      %v608 = vmax.f32 %v588, 0.0
      %v609 = vmax.f32 %v562, 0.0
      %v610 = vmax.f32 %v591, 0.0
      %v611 = vmax.f32 %v564, 0.0
      %v612 = vmax.f32 %v593, 0.0
      %v613 = vmax.f32 %v567, 0.0
      %v614 = vmax.f32 %v596, 0.0
      %v615 = vmax.f32 %v569, 0.0
      %v616 = vmax.f32 %v598, 0.0
      %v617 = vmax.f32 %v572, 0.0
      %v618 = vmax.f32 %v601, 0.0
      %v619 = vmax.f32 %v574, 0.0
      %v620 = vmax.f32 %v603, 0.0
      %v621 = vpack.c.bf16 %v606, %v605
      %v622 = vpack.c.bf16 %v608, %v607
      %v623 = vpack.c.bf16 %v610, %v609
      %v624 = vpack.c.bf16 %v612, %v611
      %v625 = vpack.c.bf16 %v614, %v613
      %v626 = vpack.c.bf16 %v616, %v615
      %v627 = vpack.c.bf16 %v618, %v617
      %v628 = vpack.c.bf16 %v620, %v619
      %629 = vst [vmem:[#allocation2] sm:$0xff] %v621
      %630 = vst [vmem:[#allocation2 + $0x8] sm:$0xff] %v622
      %631 = vst [vmem:[#allocation2 + $0x10] sm:$0xff] %v623
      %632 = vst [vmem:[#allocation2 + $0x18] sm:$0xff] %v624
      %633 = vst [vmem:[#allocation2 + $0x20] sm:$0xff] %v625
      %634 = vst [vmem:[#allocation2 + $0x28] sm:$0xff] %v626
      %635 = vst [vmem:[#allocation2 + $0x30] sm:$0xff] %v627
      %636 = vst [vmem:[#allocation2 + $0x38] sm:$0xff] %v628
      %v637 = vld [vmem:[#allocation2] sm:$0xff]
      %v638 = vld [vmem:[#allocation2 + $0x8] sm:$0xff]
      %v639 = vld [vmem:[#allocation2 + $0x10] sm:$0xff]
      %v640 = vld [vmem:[#allocation2 + $0x18] sm:$0xff]
      %v641 = vld [vmem:[#allocation2 + $0x20] sm:$0xff]
      %v642 = vld [vmem:[#allocation2 + $0x28] sm:$0xff]
      %v643 = vld [vmem:[#allocation2 + $0x30] sm:$0xff]
      %v644 = vld [vmem:[#allocation2 + $0x38] sm:$0xff]
      %v645 = vld [vmem:[%s3] sm:$0xf]
      %v646 = vld [vmem:[%s3 + $0x4] sm:$0xf]
      %v647 = vld [vmem:[%s3 + $0x8] sm:$0xf]
      %v648 = vld [vmem:[%s3 + $0xc] sm:$0xf]
      %v649 = vld [vmem:[%s3 + $0x10] sm:$0xf]
      %v650 = vld [vmem:[%s3 + $0x14] sm:$0xf]
      %v651 = vld [vmem:[%s3 + $0x18] sm:$0xf]
      %v652 = vld [vmem:[%s3 + $0x1c] sm:$0xf]
      %v653 = vld [vmem:[%s4] sm:$0xff]
      %v654 = vld [vmem:[%s4 + $0x8] sm:$0xff]
      %v655 = vld [vmem:[%s4 + $0x10] sm:$0xff]
      %v656 = vld [vmem:[%s4 + $0x18] sm:$0xff]
      %v657 = vld [vmem:[%s4 + $0x20] sm:$0xff]
      %v658 = vld [vmem:[%s4 + $0x28] sm:$0xff]
      %v659 = vld [vmem:[%s4 + $0x30] sm:$0xff]
      %v660 = vld [vmem:[%s4 + $0x38] sm:$0xff]
      %662 = vset.pattern.permute.xlu0 0
      %663 = vperm.xlu0 %662, %v653
      %v664 = vpop.permute.xlu0 %663
      %667 = vset.pattern.permute.xlu0 0
      %668 = vperm.xlu0 %667, %v654
      %v669 = vpop.permute.xlu0 %668
      %672 = vset.pattern.permute.xlu0 0
      %673 = vperm.xlu0 %672, %v655
      %v674 = vpop.permute.xlu0 %673
      %677 = vset.pattern.permute.xlu0 0
      %678 = vperm.xlu0 %677, %v656
      %v679 = vpop.permute.xlu0 %678
      %682 = vset.pattern.permute.xlu0 0
      %683 = vperm.xlu0 %682, %v657
      %v684 = vpop.permute.xlu0 %683
      %687 = vset.pattern.permute.xlu0 0
      %688 = vperm.xlu0 %687, %v658
      %v689 = vpop.permute.xlu0 %688
      %692 = vset.pattern.permute.xlu0 0
      %693 = vperm.xlu0 %692, %v659
      %v694 = vpop.permute.xlu0 %693
      %697 = vset.pattern.permute.xlu0 0
      %698 = vperm.xlu0 %697, %v660
      %v699 = vpop.permute.xlu0 %698
      %v709 = vunpack.c.l.b16 %v645
      %v710 = vunpack.c.l.b16 %v646
      %v711 = vunpack.c.l.b16 %v647
      %v712 = vunpack.c.l.b16 %v648
      %v713 = vunpack.c.l.b16 %v649
      %v714 = vunpack.c.l.b16 %v650
      %v715 = vunpack.c.l.b16 %v651
      %v716 = vunpack.c.l.b16 %v652
      %v717 = vpack.c.b16 %v710, %v709
      %v718 = vpack.c.b16 %v712, %v711
      %v719 = vpack.c.b16 %v714, %v713
      %v720 = vpack.c.b16 %v716, %v715
      %v729 = vunpack.c.l.b16 %v637
      %v730 = vunpack.c.h.b16 %v637
      %v731 = vunpack.c.l.b16 %v638
      %v732 = vunpack.c.h.b16 %v638
      %v733 = vunpack.c.l.b16 %v639
      %v734 = vunpack.c.h.b16 %v639
      %v735 = vunpack.c.l.b16 %v640
      %v736 = vunpack.c.h.b16 %v640
      %v737 = vunpack.c.l.b16 %v641
      %v738 = vunpack.c.h.b16 %v641
      %v739 = vunpack.c.l.b16 %v642
      %v740 = vunpack.c.h.b16 %v642
      %v741 = vunpack.c.l.b16 %v643
      %v742 = vunpack.c.h.b16 %v643
      %v743 = vunpack.c.l.b16 %v644
      %v744 = vunpack.c.h.b16 %v644
      %v745 = vpack.c.b16 %v731, %v729
      %v746 = vpack.c.b16 %v732, %v730
      %v747 = vpack.c.b16 %v735, %v733
      %v748 = vpack.c.b16 %v736, %v734
      %v749 = vpack.c.b16 %v739, %v737
      %v750 = vpack.c.b16 %v740, %v738
      %v751 = vpack.c.b16 %v743, %v741
      %v752 = vpack.c.b16 %v744, %v742
      %vm761 = vcmask 523264
      %v763 = vsel %vm761, %v717, 0
      %v766 = vsel %vm761, %v718, 0
      %v769 = vsel %vm761, %v719, 0
      %v772 = vsel %vm761, %v720, 0
      %774 = vmatpush.bf16.msra.mxu0 0
      %775 = vmatpush.bf16.msra.mxu0 0
      %776 = vmatpush.bf16.msra.mxu0 0
      %777 = vmatpush.bf16.msra.mxu0 0
      %778 = vmatpush.bf16.msra.mxu0 %v751
      %779 = vmatpush.bf16.msra.mxu0 %v749
      %780 = vmatpush.bf16.msra.mxu0 %v747
      %781 = vmatpush.bf16.msra.mxu0 %v745
      %782 = vmatmul.bf16.gmra.mxu0 %v763
      %v783 = vpop.f32.mrf.mxu0
      %v784 = vadd.f32 %v664, %v783
      %v785 = vpop.f32.mrf.mxu0
      %v786 = vadd.f32 %v669, %v785
      %787 = vmatmul.bf16.gmra.mxu0 %v766
      %v788 = vpop.f32.mrf.mxu0
      %v789 = vadd.f32 %v674, %v788
      %v790 = vpop.f32.mrf.mxu0
      %v791 = vadd.f32 %v679, %v790
      %792 = vmatmul.bf16.gmra.mxu0 %v769
      %v793 = vpop.f32.mrf.mxu0
      %v794 = vadd.f32 %v684, %v793
      %v795 = vpop.f32.mrf.mxu0
      %v796 = vadd.f32 %v689, %v795
      %797 = vmatmul.bf16.gmra.mxu0 %v772
      %v798 = vpop.f32.mrf.mxu0
      %v799 = vadd.f32 %v694, %v798
      %v800 = vpop.f32.mrf.mxu0
      %v801 = vadd.f32 %v699, %v800
      %802 = vdwg.mxu0
      %803 = vmatpush.bf16.msra.mxu0 0
      %804 = vmatpush.bf16.msra.mxu0 0
      %805 = vmatpush.bf16.msra.mxu0 0
      %806 = vmatpush.bf16.msra.mxu0 0
      %807 = vmatpush.bf16.msra.mxu0 %v752
      %808 = vmatpush.bf16.msra.mxu0 %v750
      %809 = vmatpush.bf16.msra.mxu0 %v748
      %810 = vmatpush.bf16.msra.mxu0 %v746
      %811 = vmatmul.bf16.gmra.mxu0 %v763
      %v812 = vpop.f32.mrf.mxu0
      %v813 = vadd.f32 %v664, %v812
      %v814 = vpop.f32.mrf.mxu0
      %v815 = vadd.f32 %v669, %v814
      %816 = vmatmul.bf16.gmra.mxu0 %v766
      %v817 = vpop.f32.mrf.mxu0
      %v818 = vadd.f32 %v674, %v817
      %v819 = vpop.f32.mrf.mxu0
      %v820 = vadd.f32 %v679, %v819
      %821 = vmatmul.bf16.gmra.mxu0 %v769
      %v822 = vpop.f32.mrf.mxu0
      %v823 = vadd.f32 %v684, %v822
      %v824 = vpop.f32.mrf.mxu0
      %v825 = vadd.f32 %v689, %v824
      %826 = vmatmul.bf16.gmra.mxu0 %v772
      %v827 = vpop.f32.mrf.mxu0
      %v828 = vadd.f32 %v694, %v827
      %v829 = vpop.f32.mrf.mxu0
      %v830 = vadd.f32 %v699, %v829
      %831 = vdwg.mxu0
      %v832 = vmax.f32 %v784, 0.0
      %v833 = vmax.f32 %v813, 0.0
      %v834 = vmax.f32 %v786, 0.0
      %v835 = vmax.f32 %v815, 0.0
      %v836 = vmax.f32 %v789, 0.0
      %v837 = vmax.f32 %v818, 0.0
      %v838 = vmax.f32 %v791, 0.0
      %v839 = vmax.f32 %v820, 0.0
      %v840 = vmax.f32 %v794, 0.0
      %v841 = vmax.f32 %v823, 0.0
      %v842 = vmax.f32 %v796, 0.0
      %v843 = vmax.f32 %v825, 0.0
      %v844 = vmax.f32 %v799, 0.0
      %v845 = vmax.f32 %v828, 0.0
      %v846 = vmax.f32 %v801, 0.0
      %v847 = vmax.f32 %v830, 0.0
      %v848 = vpack.c.bf16 %v833, %v832
      %v849 = vpack.c.bf16 %v835, %v834
      %v850 = vpack.c.bf16 %v837, %v836
      %v851 = vpack.c.bf16 %v839, %v838
      %v852 = vpack.c.bf16 %v841, %v840
      %v853 = vpack.c.bf16 %v843, %v842
      %v854 = vpack.c.bf16 %v845, %v844
      %v855 = vpack.c.bf16 %v847, %v846
      %856 = vst [vmem:[#allocation2 + $0x40] sm:$0xff] %v848
      %857 = vst [vmem:[#allocation2 + $0x48] sm:$0xff] %v849
      %858 = vst [vmem:[#allocation2 + $0x50] sm:$0xff] %v850
      %859 = vst [vmem:[#allocation2 + $0x58] sm:$0xff] %v851
      %860 = vst [vmem:[#allocation2 + $0x60] sm:$0xff] %v852
      %861 = vst [vmem:[#allocation2 + $0x68] sm:$0xff] %v853
      %862 = vst [vmem:[#allocation2 + $0x70] sm:$0xff] %v854
      %863 = vst [vmem:[#allocation2 + $0x78] sm:$0xff] %v855
      %v864 = vld [vmem:[#allocation2] sm:$0xff]
      %v865 = vld [vmem:[#allocation2 + $0x8] sm:$0xff]
      %v866 = vld [vmem:[#allocation2 + $0x10] sm:$0xff]
      %v867 = vld [vmem:[#allocation2 + $0x18] sm:$0xff]
      %v868 = vld [vmem:[#allocation2 + $0x20] sm:$0xff]
      %v869 = vld [vmem:[#allocation2 + $0x28] sm:$0xff]
      %v870 = vld [vmem:[#allocation2 + $0x30] sm:$0xff]
      %v871 = vld [vmem:[#allocation2 + $0x38] sm:$0xff]
      %v872 = vld [vmem:[#allocation2 + $0x40] sm:$0xff]
      %v873 = vld [vmem:[#allocation2 + $0x48] sm:$0xff]
      %v874 = vld [vmem:[#allocation2 + $0x50] sm:$0xff]
      %v875 = vld [vmem:[#allocation2 + $0x58] sm:$0xff]
      %v876 = vld [vmem:[#allocation2 + $0x60] sm:$0xff]
      %v877 = vld [vmem:[#allocation2 + $0x68] sm:$0xff]
      %v878 = vld [vmem:[#allocation2 + $0x70] sm:$0xff]
      %v879 = vld [vmem:[#allocation2 + $0x78] sm:$0xff]
      %v880 = vld [vmem:[%s5] sm:$0xf]
      %v881 = vld [vmem:[%s5 + $0x4] sm:$0xf]
      %v882 = vld [vmem:[%s5 + $0x8] sm:$0xf]
      %v883 = vld [vmem:[%s5 + $0xc] sm:$0xf]
      %v884 = vld [vmem:[%s5 + $0x10] sm:$0xf]
      %v885 = vld [vmem:[%s5 + $0x14] sm:$0xf]
      %v886 = vld [vmem:[%s5 + $0x18] sm:$0xf]
      %v887 = vld [vmem:[%s5 + $0x1c] sm:$0xf]
      %v888 = vld [vmem:[%s6] sm:$0xff]
      %v889 = vld [vmem:[%s6 + $0x8] sm:$0xff]
      %v890 = vld [vmem:[%s6 + $0x10] sm:$0xff]
      %v891 = vld [vmem:[%s6 + $0x18] sm:$0xff]
      %v892 = vld [vmem:[%s6 + $0x20] sm:$0xff]
      %v893 = vld [vmem:[%s6 + $0x28] sm:$0xff]
      %v894 = vld [vmem:[%s6 + $0x30] sm:$0xff]
      %v895 = vld [vmem:[%s6 + $0x38] sm:$0xff]
      %897 = vset.pattern.permute.xlu0 0
      %898 = vperm.xlu0 %897, %v888
      %v899 = vpop.permute.xlu0 %898
      %902 = vset.pattern.permute.xlu0 0
      %903 = vperm.xlu0 %902, %v889
      %v904 = vpop.permute.xlu0 %903
      %907 = vset.pattern.permute.xlu0 0
      %908 = vperm.xlu0 %907, %v890
      %v909 = vpop.permute.xlu0 %908
      %912 = vset.pattern.permute.xlu0 0
      %913 = vperm.xlu0 %912, %v891
      %v914 = vpop.permute.xlu0 %913
      %917 = vset.pattern.permute.xlu0 0
      %918 = vperm.xlu0 %917, %v892
      %v919 = vpop.permute.xlu0 %918
      %922 = vset.pattern.permute.xlu0 0
      %923 = vperm.xlu0 %922, %v893
      %v924 = vpop.permute.xlu0 %923
      %927 = vset.pattern.permute.xlu0 0
      %928 = vperm.xlu0 %927, %v894
      %v929 = vpop.permute.xlu0 %928
      %932 = vset.pattern.permute.xlu0 0
      %933 = vperm.xlu0 %932, %v895
      %v934 = vpop.permute.xlu0 %933
      %v944 = vunpack.c.l.b16 %v880
      %v945 = vunpack.c.l.b16 %v881
      %v946 = vunpack.c.l.b16 %v882
      %v947 = vunpack.c.l.b16 %v883
      %v948 = vunpack.c.l.b16 %v884
      %v949 = vunpack.c.l.b16 %v885
      %v950 = vunpack.c.l.b16 %v886
      %v951 = vunpack.c.l.b16 %v887
      %v952 = vpack.c.b16 %v945, %v944
      %v953 = vpack.c.b16 %v947, %v946
      %v954 = vpack.c.b16 %v949, %v948
      %v955 = vpack.c.b16 %v951, %v950
      %v976 = vunpack.c.l.b16 %v864
      %v977 = vunpack.c.h.b16 %v864
      %v978 = vunpack.c.l.b16 %v865
      %v979 = vunpack.c.h.b16 %v865
      %v980 = vunpack.c.l.b16 %v866
      %v981 = vunpack.c.h.b16 %v866
      %v982 = vunpack.c.l.b16 %v867
      %v983 = vunpack.c.h.b16 %v867
      %v984 = vunpack.c.l.b16 %v868
      %v985 = vunpack.c.h.b16 %v868
      %v986 = vunpack.c.l.b16 %v869
      %v987 = vunpack.c.h.b16 %v869
      %v988 = vunpack.c.l.b16 %v870
      %v989 = vunpack.c.h.b16 %v870
      %v990 = vunpack.c.l.b16 %v871
      %v991 = vunpack.c.h.b16 %v871
      %v992 = vunpack.c.l.b16 %v872
      %v993 = vunpack.c.h.b16 %v872
      %v994 = vunpack.c.l.b16 %v873
      %v995 = vunpack.c.h.b16 %v873
      %v996 = vunpack.c.l.b16 %v874
      %v997 = vunpack.c.h.b16 %v874
      %v998 = vunpack.c.l.b16 %v875
      %v999 = vunpack.c.h.b16 %v875
      %v1000 = vunpack.c.l.b16 %v876
      %v1001 = vunpack.c.h.b16 %v876
      %v1002 = vunpack.c.l.b16 %v877
      %v1003 = vunpack.c.h.b16 %v877
      %v1004 = vunpack.c.l.b16 %v878
      %v1005 = vunpack.c.h.b16 %v878
      %v1006 = vunpack.c.l.b16 %v879
      %v1007 = vunpack.c.h.b16 %v879
      %v1008 = vpack.c.b16 %v978, %v976
      %v1009 = vpack.c.b16 %v979, %v977
      %v1010 = vpack.c.b16 %v982, %v980
      %v1011 = vpack.c.b16 %v983, %v981
      %v1012 = vpack.c.b16 %v986, %v984
      %v1013 = vpack.c.b16 %v987, %v985
      %v1014 = vpack.c.b16 %v990, %v988
      %v1015 = vpack.c.b16 %v991, %v989
      %v1016 = vpack.c.b16 %v994, %v992
      %v1017 = vpack.c.b16 %v995, %v993
      %v1018 = vpack.c.b16 %v998, %v996
      %v1019 = vpack.c.b16 %v999, %v997
      %v1020 = vpack.c.b16 %v1002, %v1000
      %v1021 = vpack.c.b16 %v1003, %v1001
      %v1022 = vpack.c.b16 %v1006, %v1004
      %v1023 = vpack.c.b16 %v1007, %v1005
      %1040 = vmatpush.bf16.msra.mxu0 %v1022
      %1041 = vmatpush.bf16.msra.mxu0 %v1020
      %1042 = vmatpush.bf16.msra.mxu0 %v1018
      %1043 = vmatpush.bf16.msra.mxu0 %v1016
      %1044 = vmatpush.bf16.msra.mxu0 %v1014
      %1045 = vmatpush.bf16.msra.mxu0 %v1012
      %1046 = vmatpush.bf16.msra.mxu0 %v1010
      %1047 = vmatpush.bf16.msra.mxu0 %v1008
      %1048 = vmatmul.bf16.gmra.mxu0 %v952
      %v1049 = vpop.f32.mrf.mxu0
      %v1050 = vadd.f32 %v899, %v1049
      %v1051 = vpop.f32.mrf.mxu0
      %v1052 = vadd.f32 %v904, %v1051
      %1053 = vmatmul.bf16.gmra.mxu0 %v953
      %v1054 = vpop.f32.mrf.mxu0
      %v1055 = vadd.f32 %v909, %v1054
      %v1056 = vpop.f32.mrf.mxu0
      %v1057 = vadd.f32 %v914, %v1056
      %1058 = vmatmul.bf16.gmra.mxu0 %v954
      %v1059 = vpop.f32.mrf.mxu0
      %v1060 = vadd.f32 %v919, %v1059
      %v1061 = vpop.f32.mrf.mxu0
      %v1062 = vadd.f32 %v924, %v1061
      %1063 = vmatmul.bf16.gmra.mxu0 %v955
      %v1064 = vpop.f32.mrf.mxu0
      %v1065 = vadd.f32 %v929, %v1064
      %v1066 = vpop.f32.mrf.mxu0
      %v1067 = vadd.f32 %v934, %v1066
      %1068 = vdwg.mxu0
      %1069 = vmatpush.bf16.msra.mxu0 %v1023
      %1070 = vmatpush.bf16.msra.mxu0 %v1021
      %1071 = vmatpush.bf16.msra.mxu0 %v1019
      %1072 = vmatpush.bf16.msra.mxu0 %v1017
      %1073 = vmatpush.bf16.msra.mxu0 %v1015
      %1074 = vmatpush.bf16.msra.mxu0 %v1013
      %1075 = vmatpush.bf16.msra.mxu0 %v1011
      %1076 = vmatpush.bf16.msra.mxu0 %v1009
      %1077 = vmatmul.bf16.gmra.mxu0 %v952
      %v1078 = vpop.f32.mrf.mxu0
      %v1079 = vadd.f32 %v899, %v1078
      %v1080 = vpop.f32.mrf.mxu0
      %v1081 = vadd.f32 %v904, %v1080
      %1082 = vmatmul.bf16.gmra.mxu0 %v953
      %v1083 = vpop.f32.mrf.mxu0
      %v1084 = vadd.f32 %v909, %v1083
      %v1085 = vpop.f32.mrf.mxu0
      %v1086 = vadd.f32 %v914, %v1085
      %1087 = vmatmul.bf16.gmra.mxu0 %v954
      %v1088 = vpop.f32.mrf.mxu0
      %v1089 = vadd.f32 %v919, %v1088
      %v1090 = vpop.f32.mrf.mxu0
      %v1091 = vadd.f32 %v924, %v1090
      %1092 = vmatmul.bf16.gmra.mxu0 %v955
      %v1093 = vpop.f32.mrf.mxu0
      %v1094 = vadd.f32 %v929, %v1093
      %v1095 = vpop.f32.mrf.mxu0
      %v1096 = vadd.f32 %v934, %v1095
      %1097 = vdwg.mxu0
      %v1098 = vmax.f32 %v1050, 0.0
      %v1099 = vmax.f32 %v1079, 0.0
      %v1100 = vmax.f32 %v1052, 0.0
      %v1101 = vmax.f32 %v1081, 0.0
      %v1102 = vmax.f32 %v1055, 0.0
      %v1103 = vmax.f32 %v1084, 0.0
      %v1104 = vmax.f32 %v1057, 0.0
      %v1105 = vmax.f32 %v1086, 0.0
      %v1106 = vmax.f32 %v1060, 0.0
      %v1107 = vmax.f32 %v1089, 0.0
      %v1108 = vmax.f32 %v1062, 0.0
      %v1109 = vmax.f32 %v1091, 0.0
      %v1110 = vmax.f32 %v1065, 0.0
      %v1111 = vmax.f32 %v1094, 0.0
      %v1112 = vmax.f32 %v1067, 0.0
      %v1113 = vmax.f32 %v1096, 0.0
      %v1114 = vpack.c.bf16 %v1099, %v1098
      %v1115 = vpack.c.bf16 %v1101, %v1100
      %v1116 = vpack.c.bf16 %v1103, %v1102
      %v1117 = vpack.c.bf16 %v1105, %v1104
      %v1118 = vpack.c.bf16 %v1107, %v1106
      %v1119 = vpack.c.bf16 %v1109, %v1108
      %v1120 = vpack.c.bf16 %v1111, %v1110
      %v1121 = vpack.c.bf16 %v1113, %v1112
      %1122 = vst [vmem:[#allocation2 + $0x80] sm:$0xff] %v1114
      %1123 = vst [vmem:[#allocation2 + $0x88] sm:$0xff] %v1115
      %1124 = vst [vmem:[#allocation2 + $0x90] sm:$0xff] %v1116
      %1125 = vst [vmem:[#allocation2 + $0x98] sm:$0xff] %v1117
      %1126 = vst [vmem:[#allocation2 + $0xa0] sm:$0xff] %v1118
      %1127 = vst [vmem:[#allocation2 + $0xa8] sm:$0xff] %v1119
      %1128 = vst [vmem:[#allocation2 + $0xb0] sm:$0xff] %v1120
      %1129 = vst [vmem:[#allocation2 + $0xb8] sm:$0xff] %v1121
      %v1130 = vld [vmem:[#allocation2] sm:$0xff]
      %v1131 = vld [vmem:[#allocation2 + $0x8] sm:$0xff]
      %v1132 = vld [vmem:[#allocation2 + $0x10] sm:$0xff]
      %v1133 = vld [vmem:[#allocation2 + $0x18] sm:$0xff]
      %v1134 = vld [vmem:[#allocation2 + $0x20] sm:$0xff]
      %v1135 = vld [vmem:[#allocation2 + $0x28] sm:$0xff]
      %v1136 = vld [vmem:[#allocation2 + $0x30] sm:$0xff]
      %v1137 = vld [vmem:[#allocation2 + $0x38] sm:$0xff]
      %v1138 = vld [vmem:[#allocation2 + $0x40] sm:$0xff]
      %v1139 = vld [vmem:[#allocation2 + $0x48] sm:$0xff]
      %v1140 = vld [vmem:[#allocation2 + $0x50] sm:$0xff]
      %v1141 = vld [vmem:[#allocation2 + $0x58] sm:$0xff]
      %v1142 = vld [vmem:[#allocation2 + $0x60] sm:$0xff]
      %v1143 = vld [vmem:[#allocation2 + $0x68] sm:$0xff]
      %v1144 = vld [vmem:[#allocation2 + $0x70] sm:$0xff]
      %v1145 = vld [vmem:[#allocation2 + $0x78] sm:$0xff]
      %v1146 = vld [vmem:[#allocation2 + $0x80] sm:$0xff]
      %v1147 = vld [vmem:[#allocation2 + $0x88] sm:$0xff]
      %v1148 = vld [vmem:[#allocation2 + $0x90] sm:$0xff]
      %v1149 = vld [vmem:[#allocation2 + $0x98] sm:$0xff]
      %v1150 = vld [vmem:[#allocation2 + $0xa0] sm:$0xff]
      %v1151 = vld [vmem:[#allocation2 + $0xa8] sm:$0xff]
      %v1152 = vld [vmem:[#allocation2 + $0xb0] sm:$0xff]
      %v1153 = vld [vmem:[#allocation2 + $0xb8] sm:$0xff]
      %v1154 = vld [vmem:[%s7] sm:$0xff]
      %v1155 = vld [vmem:[%s7 + $0x8] sm:$0xff]
      %v1156 = vld [vmem:[%s7 + $0x10] sm:$0xff]
      %v1157 = vld [vmem:[%s7 + $0x18] sm:$0xff]
      %v1158 = vld [vmem:[%s7 + $0x20] sm:$0xff]
      %v1159 = vld [vmem:[%s7 + $0x28] sm:$0xff]
      %v1160 = vld [vmem:[%s7 + $0x30] sm:$0xff]
      %v1161 = vld [vmem:[%s7 + $0x38] sm:$0xff]
      %v1162 = vld [vmem:[%s8] sm:$0xff]
      %v1163 = vld [vmem:[%s8 + $0x8] sm:$0xff]
      %v1164 = vld [vmem:[%s8 + $0x10] sm:$0xff]
      %v1165 = vld [vmem:[%s8 + $0x18] sm:$0xff]
      %v1166 = vld [vmem:[%s8 + $0x20] sm:$0xff]
      %v1167 = vld [vmem:[%s8 + $0x28] sm:$0xff]
      %v1168 = vld [vmem:[%s8 + $0x30] sm:$0xff]
      %v1169 = vld [vmem:[%s8 + $0x38] sm:$0xff]
      %1171 = vset.pattern.permute.xlu0 0
      %1172 = vperm.xlu0 %1171, %v1162
      %v1173 = vpop.permute.xlu0 %1172
      %1176 = vset.pattern.permute.xlu0 0
      %1177 = vperm.xlu0 %1176, %v1163
      %v1178 = vpop.permute.xlu0 %1177
      %1181 = vset.pattern.permute.xlu0 0
      %1182 = vperm.xlu0 %1181, %v1164
      %v1183 = vpop.permute.xlu0 %1182
      %1186 = vset.pattern.permute.xlu0 0
      %1187 = vperm.xlu0 %1186, %v1165
      %v1188 = vpop.permute.xlu0 %1187
      %1191 = vset.pattern.permute.xlu0 0
      %1192 = vperm.xlu0 %1191, %v1166
      %v1193 = vpop.permute.xlu0 %1192
      %1196 = vset.pattern.permute.xlu0 0
      %1197 = vperm.xlu0 %1196, %v1167
      %v1198 = vpop.permute.xlu0 %1197
      %1201 = vset.pattern.permute.xlu0 0
      %1202 = vperm.xlu0 %1201, %v1168
      %v1203 = vpop.permute.xlu0 %1202
      %1206 = vset.pattern.permute.xlu0 0
      %1207 = vperm.xlu0 %1206, %v1169
      %v1208 = vpop.permute.xlu0 %1207
      %v1218 = vunpack.c.l.b16 %v1154
      %v1219 = vunpack.c.h.b16 %v1154
      %v1220 = vunpack.c.l.b16 %v1155
      %v1221 = vunpack.c.h.b16 %v1155
      %v1222 = vunpack.c.l.b16 %v1156
      %v1223 = vunpack.c.h.b16 %v1156
      %v1224 = vunpack.c.l.b16 %v1157
      %v1225 = vunpack.c.h.b16 %v1157
      %v1226 = vunpack.c.l.b16 %v1158
      %v1227 = vunpack.c.h.b16 %v1158
      %v1228 = vunpack.c.l.b16 %v1159
      %v1229 = vunpack.c.h.b16 %v1159
      %v1230 = vunpack.c.l.b16 %v1160
      %v1231 = vunpack.c.h.b16 %v1160
      %v1232 = vunpack.c.l.b16 %v1161
      %v1233 = vunpack.c.h.b16 %v1161
      %v1234 = vpack.c.b16 %v1220, %v1218
      %v1235 = vpack.c.b16 %v1221, %v1219
      %v1236 = vpack.c.b16 %v1224, %v1222
      %v1237 = vpack.c.b16 %v1225, %v1223
      %v1238 = vpack.c.b16 %v1228, %v1226
      %v1239 = vpack.c.b16 %v1229, %v1227
      %v1240 = vpack.c.b16 %v1232, %v1230
      %v1241 = vpack.c.b16 %v1233, %v1231
      %v1270 = vunpack.c.l.b16 %v1130
      %v1271 = vunpack.c.h.b16 %v1130
      %v1272 = vunpack.c.l.b16 %v1131
      %v1273 = vunpack.c.h.b16 %v1131
      %v1274 = vunpack.c.l.b16 %v1132
      %v1275 = vunpack.c.h.b16 %v1132
      %v1276 = vunpack.c.l.b16 %v1133
      %v1277 = vunpack.c.h.b16 %v1133
      %v1278 = vunpack.c.l.b16 %v1134
      %v1279 = vunpack.c.h.b16 %v1134
      %v1280 = vunpack.c.l.b16 %v1135
      %v1281 = vunpack.c.h.b16 %v1135
      %v1282 = vunpack.c.l.b16 %v1136
      %v1283 = vunpack.c.h.b16 %v1136
      %v1284 = vunpack.c.l.b16 %v1137
      %v1285 = vunpack.c.h.b16 %v1137
      %v1286 = vunpack.c.l.b16 %v1138
      %v1287 = vunpack.c.h.b16 %v1138
      %v1288 = vunpack.c.l.b16 %v1139
      %v1289 = vunpack.c.h.b16 %v1139
      %v1290 = vunpack.c.l.b16 %v1140
      %v1291 = vunpack.c.h.b16 %v1140
      %v1292 = vunpack.c.l.b16 %v1141
      %v1293 = vunpack.c.h.b16 %v1141
      %v1294 = vunpack.c.l.b16 %v1142
      %v1295 = vunpack.c.h.b16 %v1142
      %v1296 = vunpack.c.l.b16 %v1143
      %v1297 = vunpack.c.h.b16 %v1143
      %v1298 = vunpack.c.l.b16 %v1144
      %v1299 = vunpack.c.h.b16 %v1144
      %v1300 = vunpack.c.l.b16 %v1145
      %v1301 = vunpack.c.h.b16 %v1145
      %v1302 = vunpack.c.l.b16 %v1146
      %v1303 = vunpack.c.h.b16 %v1146
      %v1304 = vunpack.c.l.b16 %v1147
      %v1305 = vunpack.c.h.b16 %v1147
      %v1306 = vunpack.c.l.b16 %v1148
      %v1307 = vunpack.c.h.b16 %v1148
      %v1308 = vunpack.c.l.b16 %v1149
      %v1309 = vunpack.c.h.b16 %v1149
      %v1310 = vunpack.c.l.b16 %v1150
      %v1311 = vunpack.c.h.b16 %v1150
      %v1312 = vunpack.c.l.b16 %v1151
      %v1313 = vunpack.c.h.b16 %v1151
      %v1314 = vunpack.c.l.b16 %v1152
      %v1315 = vunpack.c.h.b16 %v1152
      %v1316 = vunpack.c.l.b16 %v1153
      %v1317 = vunpack.c.h.b16 %v1153
      %v1318 = vpack.c.b16 %v1272, %v1270
      %v1319 = vpack.c.b16 %v1273, %v1271
      %v1320 = vpack.c.b16 %v1276, %v1274
      %v1321 = vpack.c.b16 %v1277, %v1275
      %v1322 = vpack.c.b16 %v1280, %v1278
      %v1323 = vpack.c.b16 %v1281, %v1279
      %v1324 = vpack.c.b16 %v1284, %v1282
      %v1325 = vpack.c.b16 %v1285, %v1283
      %v1326 = vpack.c.b16 %v1288, %v1286
      %v1327 = vpack.c.b16 %v1289, %v1287
      %v1328 = vpack.c.b16 %v1292, %v1290
      %v1329 = vpack.c.b16 %v1293, %v1291
      %v1330 = vpack.c.b16 %v1296, %v1294
      %v1331 = vpack.c.b16 %v1297, %v1295
      %v1332 = vpack.c.b16 %v1300, %v1298
      %v1333 = vpack.c.b16 %v1301, %v1299
      %v1334 = vpack.c.b16 %v1304, %v1302
      %v1335 = vpack.c.b16 %v1305, %v1303
      %v1336 = vpack.c.b16 %v1308, %v1306
      %v1337 = vpack.c.b16 %v1309, %v1307
      %v1338 = vpack.c.b16 %v1312, %v1310
      %v1339 = vpack.c.b16 %v1313, %v1311
      %v1340 = vpack.c.b16 %v1316, %v1314
      %v1341 = vpack.c.b16 %v1317, %v1315
      %v1367 = vsel %vm761, %v1235, 0
      %v1370 = vsel %vm761, %v1237, 0
      %v1373 = vsel %vm761, %v1239, 0
      %v1376 = vsel %vm761, %v1241, 0
      %1378 = vmatpush.bf16.msra.mxu0 %v1332
      %1379 = vmatpush.bf16.msra.mxu0 %v1330
      %1380 = vmatpush.bf16.msra.mxu0 %v1328
      %1381 = vmatpush.bf16.msra.mxu0 %v1326
      %1382 = vmatpush.bf16.msra.mxu0 %v1324
      %1383 = vmatpush.bf16.msra.mxu0 %v1322
      %1384 = vmatpush.bf16.msra.mxu0 %v1320
      %1385 = vmatpush.bf16.msra.mxu0 %v1318
      %1386 = vmatmul.bf16.gmra.mxu0 %v1234
      %v1387 = vpop.f32.mrf.mxu0
      %v1388 = vadd.f32 %v1173, %v1387
      %v1389 = vpop.f32.mrf.mxu0
      %v1390 = vadd.f32 %v1178, %v1389
      %1391 = vmatmul.bf16.gmra.mxu0 %v1236
      %v1392 = vpop.f32.mrf.mxu0
      %v1393 = vadd.f32 %v1183, %v1392
      %v1394 = vpop.f32.mrf.mxu0
      %v1395 = vadd.f32 %v1188, %v1394
      %1396 = vmatmul.bf16.gmra.mxu0 %v1238
      %v1397 = vpop.f32.mrf.mxu0
      %v1398 = vadd.f32 %v1193, %v1397
      %v1399 = vpop.f32.mrf.mxu0
      %v1400 = vadd.f32 %v1198, %v1399
      %1401 = vmatmul.bf16.gmra.mxu0 %v1240
      %v1402 = vpop.f32.mrf.mxu0
      %v1403 = vadd.f32 %v1203, %v1402
      %v1404 = vpop.f32.mrf.mxu0
      %v1405 = vadd.f32 %v1208, %v1404
      %1406 = vdwg.mxu0
      %1407 = vmatpush.bf16.msra.mxu0 0
      %1408 = vmatpush.bf16.msra.mxu0 0
      %1409 = vmatpush.bf16.msra.mxu0 0
      %1410 = vmatpush.bf16.msra.mxu0 0
      %1411 = vmatpush.bf16.msra.mxu0 %v1340
      %1412 = vmatpush.bf16.msra.mxu0 %v1338
      %1413 = vmatpush.bf16.msra.mxu0 %v1336
      %1414 = vmatpush.bf16.msra.mxu0 %v1334
      %1415 = vmatmul.bf16.gmra.mxu0 %v1367
      %v1416 = vpop.f32.mrf.mxu0
      %v1417 = vadd.f32 %v1388, %v1416
      %v1418 = vpop.f32.mrf.mxu0
      %v1419 = vadd.f32 %v1390, %v1418
      %1420 = vmatmul.bf16.gmra.mxu0 %v1370
      %v1421 = vpop.f32.mrf.mxu0
      %v1422 = vadd.f32 %v1393, %v1421
      %v1423 = vpop.f32.mrf.mxu0
      %v1424 = vadd.f32 %v1395, %v1423
      %1425 = vmatmul.bf16.gmra.mxu0 %v1373
      %v1426 = vpop.f32.mrf.mxu0
      %v1427 = vadd.f32 %v1398, %v1426
      %v1428 = vpop.f32.mrf.mxu0
      %v1429 = vadd.f32 %v1400, %v1428
      %1430 = vmatmul.bf16.gmra.mxu0 %v1376
      %v1431 = vpop.f32.mrf.mxu0
      %v1432 = vadd.f32 %v1403, %v1431
      %v1433 = vpop.f32.mrf.mxu0
      %v1434 = vadd.f32 %v1405, %v1433
      %1435 = vdwg.mxu0
      %1436 = vmatpush.bf16.msra.mxu0 %v1333
      %1437 = vmatpush.bf16.msra.mxu0 %v1331
      %1438 = vmatpush.bf16.msra.mxu0 %v1329
      %1439 = vmatpush.bf16.msra.mxu0 %v1327
      %1440 = vmatpush.bf16.msra.mxu0 %v1325
      %1441 = vmatpush.bf16.msra.mxu0 %v1323
      %1442 = vmatpush.bf16.msra.mxu0 %v1321
      %1443 = vmatpush.bf16.msra.mxu0 %v1319
      %1444 = vmatmul.bf16.gmra.mxu0 %v1234
      %v1445 = vpop.f32.mrf.mxu0
      %v1446 = vadd.f32 %v1173, %v1445
      %v1447 = vpop.f32.mrf.mxu0
      %v1448 = vadd.f32 %v1178, %v1447
      %1449 = vmatmul.bf16.gmra.mxu0 %v1236
      %v1450 = vpop.f32.mrf.mxu0
      %v1451 = vadd.f32 %v1183, %v1450
      %v1452 = vpop.f32.mrf.mxu0
      %v1453 = vadd.f32 %v1188, %v1452
      %1454 = vmatmul.bf16.gmra.mxu0 %v1238
      %v1455 = vpop.f32.mrf.mxu0
      %v1456 = vadd.f32 %v1193, %v1455
      %v1457 = vpop.f32.mrf.mxu0
      %v1458 = vadd.f32 %v1198, %v1457
      %1459 = vmatmul.bf16.gmra.mxu0 %v1240
      %v1460 = vpop.f32.mrf.mxu0
      %v1461 = vadd.f32 %v1203, %v1460
      %v1462 = vpop.f32.mrf.mxu0
      %v1463 = vadd.f32 %v1208, %v1462
      %1464 = vdwg.mxu0
      %1465 = vmatpush.bf16.msra.mxu0 0
      %1466 = vmatpush.bf16.msra.mxu0 0
      %1467 = vmatpush.bf16.msra.mxu0 0
      %1468 = vmatpush.bf16.msra.mxu0 0
      %1469 = vmatpush.bf16.msra.mxu0 %v1341
      %1470 = vmatpush.bf16.msra.mxu0 %v1339
      %1471 = vmatpush.bf16.msra.mxu0 %v1337
      %1472 = vmatpush.bf16.msra.mxu0 %v1335
      %1473 = vmatmul.bf16.gmra.mxu0 %v1367
      %v1474 = vpop.f32.mrf.mxu0
      %v1475 = vadd.f32 %v1446, %v1474
      %v1476 = vpop.f32.mrf.mxu0
      %v1477 = vadd.f32 %v1448, %v1476
      %1478 = vmatmul.bf16.gmra.mxu0 %v1370
      %v1479 = vpop.f32.mrf.mxu0
      %v1480 = vadd.f32 %v1451, %v1479
      %v1481 = vpop.f32.mrf.mxu0
      %v1482 = vadd.f32 %v1453, %v1481
      %1483 = vmatmul.bf16.gmra.mxu0 %v1373
      %v1484 = vpop.f32.mrf.mxu0
      %v1485 = vadd.f32 %v1456, %v1484
      %v1486 = vpop.f32.mrf.mxu0
      %v1487 = vadd.f32 %v1458, %v1486
      %1488 = vmatmul.bf16.gmra.mxu0 %v1376
      %v1489 = vpop.f32.mrf.mxu0
      %v1490 = vadd.f32 %v1461, %v1489
      %v1491 = vpop.f32.mrf.mxu0
      %v1492 = vadd.f32 %v1463, %v1491
      %1493 = vdwg.mxu0
      %v1494 = vmax.f32 %v1417, 0.0
      %v1495 = vmax.f32 %v1475, 0.0
      %v1496 = vmax.f32 %v1419, 0.0
      %v1497 = vmax.f32 %v1477, 0.0
      %v1498 = vmax.f32 %v1422, 0.0
      %v1499 = vmax.f32 %v1480, 0.0
      %v1500 = vmax.f32 %v1424, 0.0
      %v1501 = vmax.f32 %v1482, 0.0
      %v1502 = vmax.f32 %v1427, 0.0
      %v1503 = vmax.f32 %v1485, 0.0
      %v1504 = vmax.f32 %v1429, 0.0
      %v1505 = vmax.f32 %v1487, 0.0
      %v1506 = vmax.f32 %v1432, 0.0
      %v1507 = vmax.f32 %v1490, 0.0
      %v1508 = vmax.f32 %v1434, 0.0
      %v1509 = vmax.f32 %v1492, 0.0
      %v1510 = vpack.c.bf16 %v1495, %v1494
      %v1511 = vpack.c.bf16 %v1497, %v1496
      %v1512 = vpack.c.bf16 %v1499, %v1498
      %v1513 = vpack.c.bf16 %v1501, %v1500
      %v1514 = vpack.c.bf16 %v1503, %v1502
      %v1515 = vpack.c.bf16 %v1505, %v1504
      %v1516 = vpack.c.bf16 %v1507, %v1506
      %v1517 = vpack.c.bf16 %v1509, %v1508
      %1518 = vst [vmem:[#allocation2 + $0xc0] sm:$0xff] %v1510
      %1519 = vst [vmem:[#allocation2 + $0xc8] sm:$0xff] %v1511
      %1520 = vst [vmem:[#allocation2 + $0xd0] sm:$0xff] %v1512
      %1521 = vst [vmem:[#allocation2 + $0xd8] sm:$0xff] %v1513
      %1522 = vst [vmem:[#allocation2 + $0xe0] sm:$0xff] %v1514
      %1523 = vst [vmem:[#allocation2 + $0xe8] sm:$0xff] %v1515
      %1524 = vst [vmem:[#allocation2 + $0xf0] sm:$0xff] %v1516
      %1525 = vst [vmem:[#allocation2 + $0xf8] sm:$0xff] %v1517
      %v1526 = vld [vmem:[#allocation2] sm:$0xff]
      %v1527 = vld [vmem:[#allocation2 + $0x8] sm:$0xff]
      %v1528 = vld [vmem:[#allocation2 + $0x10] sm:$0xff]
      %v1529 = vld [vmem:[#allocation2 + $0x18] sm:$0xff]
      %v1530 = vld [vmem:[#allocation2 + $0x20] sm:$0xff]
      %v1531 = vld [vmem:[#allocation2 + $0x28] sm:$0xff]
      %v1532 = vld [vmem:[#allocation2 + $0x30] sm:$0xff]
      %v1533 = vld [vmem:[#allocation2 + $0x38] sm:$0xff]
      %v1534 = vld [vmem:[#allocation2 + $0x40] sm:$0xff]
      %v1535 = vld [vmem:[#allocation2 + $0x48] sm:$0xff]
      %v1536 = vld [vmem:[#allocation2 + $0x50] sm:$0xff]
      %v1537 = vld [vmem:[#allocation2 + $0x58] sm:$0xff]
      %v1538 = vld [vmem:[#allocation2 + $0x60] sm:$0xff]
      %v1539 = vld [vmem:[#allocation2 + $0x68] sm:$0xff]
      %v1540 = vld [vmem:[#allocation2 + $0x70] sm:$0xff]
      %v1541 = vld [vmem:[#allocation2 + $0x78] sm:$0xff]
      %v1542 = vld [vmem:[#allocation2 + $0x80] sm:$0xff]
      %v1543 = vld [vmem:[#allocation2 + $0x88] sm:$0xff]
      %v1544 = vld [vmem:[#allocation2 + $0x90] sm:$0xff]
      %v1545 = vld [vmem:[#allocation2 + $0x98] sm:$0xff]
      %v1546 = vld [vmem:[#allocation2 + $0xa0] sm:$0xff]
      %v1547 = vld [vmem:[#allocation2 + $0xa8] sm:$0xff]
      %v1548 = vld [vmem:[#allocation2 + $0xb0] sm:$0xff]
      %v1549 = vld [vmem:[#allocation2 + $0xb8] sm:$0xff]
      %v1550 = vld [vmem:[#allocation2 + $0xc0] sm:$0xff]
      %v1551 = vld [vmem:[#allocation2 + $0xc8] sm:$0xff]
      %v1552 = vld [vmem:[#allocation2 + $0xd0] sm:$0xff]
      %v1553 = vld [vmem:[#allocation2 + $0xd8] sm:$0xff]
      %v1554 = vld [vmem:[#allocation2 + $0xe0] sm:$0xff]
      %v1555 = vld [vmem:[#allocation2 + $0xe8] sm:$0xff]
      %v1556 = vld [vmem:[#allocation2 + $0xf0] sm:$0xff]
      %v1557 = vld [vmem:[#allocation2 + $0xf8] sm:$0xff]
      %v1558 = vld [vmem:[%s9] sm:$0xff]
      %v1559 = vld [vmem:[%s9 + $0x8] sm:$0xff]
      %v1560 = vld [vmem:[%s9 + $0x10] sm:$0xff]
      %v1561 = vld [vmem:[%s9 + $0x18] sm:$0xff]
      %v1562 = vld [vmem:[%s9 + $0x20] sm:$0xff]
      %v1563 = vld [vmem:[%s9 + $0x28] sm:$0xff]
      %v1564 = vld [vmem:[%s9 + $0x30] sm:$0xff]
      %v1565 = vld [vmem:[%s9 + $0x38] sm:$0xff]
      %v1566 = vld [vmem:[%s9 + $0x40] sm:$0x33]
      %v1576 = vunpack.c.l.b16 %v1558
      %v1577 = vunpack.c.h.b16 %v1558
      %v1578 = vunpack.c.l.b16 %v1559
      %v1579 = vunpack.c.h.b16 %v1559
      %v1580 = vunpack.c.l.b16 %v1560
      %v1581 = vunpack.c.h.b16 %v1560
      %v1582 = vunpack.c.l.b16 %v1561
      %v1583 = vunpack.c.h.b16 %v1561
      %v1584 = vunpack.c.l.b16 %v1562
      %v1585 = vunpack.c.h.b16 %v1562
      %v1586 = vunpack.c.l.b16 %v1563
      %v1587 = vunpack.c.h.b16 %v1563
      %v1588 = vunpack.c.l.b16 %v1564
      %v1589 = vunpack.c.h.b16 %v1564
      %v1590 = vunpack.c.l.b16 %v1565
      %v1591 = vunpack.c.h.b16 %v1565
      %v1592 = vunpack.c.l.b16 %v1566
      %v1593 = vunpack.c.h.b16 %v1566
      %v1594 = vpack.c.b16 %v1578, %v1576
      %v1595 = vpack.c.b16 %v1579, %v1577
      %v1596 = vpack.c.b16 %v1582, %v1580
      %v1597 = vpack.c.b16 %v1583, %v1581
      %v1598 = vpack.c.b16 %v1586, %v1584
      %v1599 = vpack.c.b16 %v1587, %v1585
      %v1600 = vpack.c.b16 %v1590, %v1588
      %v1601 = vpack.c.b16 %v1591, %v1589
      %v1602 = vpack.c.b16 %v1592, %v1592
      %v1603 = vpack.c.b16 %v1593, %v1593
      %v1646 = vunpack.c.l.b16 %v1526
      %v1647 = vunpack.c.h.b16 %v1526
      %v1648 = vunpack.c.l.b16 %v1527
      %v1649 = vunpack.c.h.b16 %v1527
      %v1650 = vunpack.c.l.b16 %v1528
      %v1651 = vunpack.c.h.b16 %v1528
      %v1652 = vunpack.c.l.b16 %v1529
      %v1653 = vunpack.c.h.b16 %v1529
      %v1654 = vunpack.c.l.b16 %v1530
      %v1655 = vunpack.c.h.b16 %v1530
      %v1656 = vunpack.c.l.b16 %v1531
      %v1657 = vunpack.c.h.b16 %v1531
      %v1658 = vunpack.c.l.b16 %v1532
      %v1659 = vunpack.c.h.b16 %v1532
      %v1660 = vunpack.c.l.b16 %v1533
      %v1661 = vunpack.c.h.b16 %v1533
      %v1662 = vunpack.c.l.b16 %v1534
      %v1663 = vunpack.c.h.b16 %v1534
      %v1664 = vunpack.c.l.b16 %v1535
      %v1665 = vunpack.c.h.b16 %v1535
      %v1666 = vunpack.c.l.b16 %v1536
      %v1667 = vunpack.c.h.b16 %v1536
      %v1668 = vunpack.c.l.b16 %v1537
      %v1669 = vunpack.c.h.b16 %v1537
      %v1670 = vunpack.c.l.b16 %v1538
      %v1671 = vunpack.c.h.b16 %v1538
      %v1672 = vunpack.c.l.b16 %v1539
      %v1673 = vunpack.c.h.b16 %v1539
      %v1674 = vunpack.c.l.b16 %v1540
      %v1675 = vunpack.c.h.b16 %v1540
      %v1676 = vunpack.c.l.b16 %v1541
      %v1677 = vunpack.c.h.b16 %v1541
      %v1678 = vunpack.c.l.b16 %v1542
      %v1679 = vunpack.c.h.b16 %v1542
      %v1680 = vunpack.c.l.b16 %v1543
      %v1681 = vunpack.c.h.b16 %v1543
      %v1682 = vunpack.c.l.b16 %v1544
      %v1683 = vunpack.c.h.b16 %v1544
      %v1684 = vunpack.c.l.b16 %v1545
      %v1685 = vunpack.c.h.b16 %v1545
      %v1686 = vunpack.c.l.b16 %v1546
      %v1687 = vunpack.c.h.b16 %v1546
      %v1688 = vunpack.c.l.b16 %v1547
      %v1689 = vunpack.c.h.b16 %v1547
      %v1690 = vunpack.c.l.b16 %v1548
      %v1691 = vunpack.c.h.b16 %v1548
      %v1692 = vunpack.c.l.b16 %v1549
      %v1693 = vunpack.c.h.b16 %v1549
      %v1694 = vunpack.c.l.b16 %v1550
      %v1695 = vunpack.c.h.b16 %v1550
      %v1696 = vunpack.c.l.b16 %v1551
      %v1697 = vunpack.c.h.b16 %v1551
      %v1698 = vunpack.c.l.b16 %v1552
      %v1699 = vunpack.c.h.b16 %v1552
      %v1700 = vunpack.c.l.b16 %v1553
      %v1701 = vunpack.c.h.b16 %v1553
      %v1702 = vunpack.c.l.b16 %v1554
      %v1703 = vunpack.c.h.b16 %v1554
      %v1704 = vunpack.c.l.b16 %v1555
      %v1705 = vunpack.c.h.b16 %v1555
      %v1706 = vunpack.c.l.b16 %v1556
      %v1707 = vunpack.c.h.b16 %v1556
      %v1708 = vunpack.c.l.b16 %v1557
      %v1709 = vunpack.c.h.b16 %v1557
      %v1710 = vpack.c.b16 %v1648, %v1646
      %v1711 = vpack.c.b16 %v1649, %v1647
      %v1712 = vpack.c.b16 %v1652, %v1650
      %v1713 = vpack.c.b16 %v1653, %v1651
      %v1714 = vpack.c.b16 %v1656, %v1654
      %v1715 = vpack.c.b16 %v1657, %v1655
      %v1716 = vpack.c.b16 %v1660, %v1658
      %v1717 = vpack.c.b16 %v1661, %v1659
      %v1718 = vpack.c.b16 %v1664, %v1662
      %v1719 = vpack.c.b16 %v1665, %v1663
      %v1720 = vpack.c.b16 %v1668, %v1666
      %v1721 = vpack.c.b16 %v1669, %v1667
      %v1722 = vpack.c.b16 %v1672, %v1670
      %v1723 = vpack.c.b16 %v1673, %v1671
      %v1724 = vpack.c.b16 %v1676, %v1674
      %v1725 = vpack.c.b16 %v1677, %v1675
      %v1726 = vpack.c.b16 %v1680, %v1678
      %v1727 = vpack.c.b16 %v1681, %v1679
      %v1728 = vpack.c.b16 %v1684, %v1682
      %v1729 = vpack.c.b16 %v1685, %v1683
      %v1730 = vpack.c.b16 %v1688, %v1686
      %v1731 = vpack.c.b16 %v1689, %v1687
      %v1732 = vpack.c.b16 %v1692, %v1690
      %v1733 = vpack.c.b16 %v1693, %v1691
      %v1734 = vpack.c.b16 %v1696, %v1694
      %v1735 = vpack.c.b16 %v1697, %v1695
      %v1736 = vpack.c.b16 %v1700, %v1698
      %v1737 = vpack.c.b16 %v1701, %v1699
      %v1738 = vpack.c.b16 %v1704, %v1702
      %v1739 = vpack.c.b16 %v1705, %v1703
      %v1740 = vpack.c.b16 %v1708, %v1706
      %v1741 = vpack.c.b16 %v1709, %v1707
      %1774 = vmatpush.bf16.msra.mxu0 %v1724
      %1775 = vmatpush.bf16.msra.mxu0 %v1722
      %1776 = vmatpush.bf16.msra.mxu0 %v1720
      %1777 = vmatpush.bf16.msra.mxu0 %v1718
      %1778 = vmatpush.bf16.msra.mxu0 %v1716
      %1779 = vmatpush.bf16.msra.mxu0 %v1714
      %1780 = vmatpush.bf16.msra.mxu0 %v1712
      %1781 = vmatpush.bf16.msra.mxu0 %v1710
      %1782 = vmatmul.bf16.gmra.mxu0 %v1594
      %v1783 = vpop.f32.mrf.mxu0
      %v1784 = vadd.f32 0.0, %v1783
      %v1785 = vpop.f32.mrf.mxu0
      %v1786 = vadd.f32 0.0, %v1785
      %1787 = vmatmul.bf16.gmra.mxu0 %v1596
      %v1788 = vpop.f32.mrf.mxu0
      %v1789 = vadd.f32 0.0, %v1788
      %v1790 = vpop.f32.mrf.mxu0
      %v1791 = vadd.f32 0.0, %v1790
      %1792 = vmatmul.bf16.gmra.mxu0 %v1598
      %v1793 = vpop.f32.mrf.mxu0
      %v1794 = vadd.f32 0.0, %v1793
      %v1795 = vpop.f32.mrf.mxu0
      %v1796 = vadd.f32 0.0, %v1795
      %1797 = vmatmul.bf16.gmra.mxu0 %v1600
      %v1798 = vpop.f32.mrf.mxu0
      %v1799 = vadd.f32 0.0, %v1798
      %v1800 = vpop.f32.mrf.mxu0
      %v1801 = vadd.f32 0.0, %v1800
      %1802 = vmatmul.bf16.gmra.mxu0 %v1602
      %v1803 = vpop.f32.mrf.mxu0
      %v1804 = vadd.f32 0.0, %v1803
      %v1805 = vpop.f32.mrf.mxu0
      %1806 = vdwg.mxu0
      %1807 = vmatpush.bf16.msra.mxu0 %v1740
      %1808 = vmatpush.bf16.msra.mxu0 %v1738
      %1809 = vmatpush.bf16.msra.mxu0 %v1736
      %1810 = vmatpush.bf16.msra.mxu0 %v1734
      %1811 = vmatpush.bf16.msra.mxu0 %v1732
      %1812 = vmatpush.bf16.msra.mxu0 %v1730
      %1813 = vmatpush.bf16.msra.mxu0 %v1728
      %1814 = vmatpush.bf16.msra.mxu0 %v1726
      %1815 = vmatmul.bf16.gmra.mxu0 %v1595
      %v1816 = vpop.f32.mrf.mxu0
      %v1817 = vadd.f32 %v1784, %v1816
      %v1818 = vpop.f32.mrf.mxu0
      %v1819 = vadd.f32 %v1786, %v1818
      %1820 = vmatmul.bf16.gmra.mxu0 %v1597
      %v1821 = vpop.f32.mrf.mxu0
      %v1822 = vadd.f32 %v1789, %v1821
      %v1823 = vpop.f32.mrf.mxu0
      %v1824 = vadd.f32 %v1791, %v1823
      %1825 = vmatmul.bf16.gmra.mxu0 %v1599
      %v1826 = vpop.f32.mrf.mxu0
      %v1827 = vadd.f32 %v1794, %v1826
      %v1828 = vpop.f32.mrf.mxu0
      %v1829 = vadd.f32 %v1796, %v1828
      %1830 = vmatmul.bf16.gmra.mxu0 %v1601
      %v1831 = vpop.f32.mrf.mxu0
      %v1832 = vadd.f32 %v1799, %v1831
      %v1833 = vpop.f32.mrf.mxu0
      %v1834 = vadd.f32 %v1801, %v1833
      %1835 = vmatmul.bf16.gmra.mxu0 %v1603
      %v1836 = vpop.f32.mrf.mxu0
      %v1837 = vadd.f32 %v1804, %v1836
      %v1838 = vpop.f32.mrf.mxu0
      %1839 = vdwg.mxu0
      %1840 = vmatpush.bf16.msra.mxu0 %v1725
      %1841 = vmatpush.bf16.msra.mxu0 %v1723
      %1842 = vmatpush.bf16.msra.mxu0 %v1721
      %1843 = vmatpush.bf16.msra.mxu0 %v1719
      %1844 = vmatpush.bf16.msra.mxu0 %v1717
      %1845 = vmatpush.bf16.msra.mxu0 %v1715
      %1846 = vmatpush.bf16.msra.mxu0 %v1713
      %1847 = vmatpush.bf16.msra.mxu0 %v1711
      %1848 = vmatmul.bf16.gmra.mxu0 %v1594
      %v1849 = vpop.f32.mrf.mxu0
      %v1850 = vadd.f32 0.0, %v1849
      %v1851 = vpop.f32.mrf.mxu0
      %v1852 = vadd.f32 0.0, %v1851
      %1853 = vmatmul.bf16.gmra.mxu0 %v1596
      %v1854 = vpop.f32.mrf.mxu0
      %v1855 = vadd.f32 0.0, %v1854
      %v1856 = vpop.f32.mrf.mxu0
      %v1857 = vadd.f32 0.0, %v1856
      %1858 = vmatmul.bf16.gmra.mxu0 %v1598
      %v1859 = vpop.f32.mrf.mxu0
      %v1860 = vadd.f32 0.0, %v1859
      %v1861 = vpop.f32.mrf.mxu0
      %v1862 = vadd.f32 0.0, %v1861
      %1863 = vmatmul.bf16.gmra.mxu0 %v1600
      %v1864 = vpop.f32.mrf.mxu0
      %v1865 = vadd.f32 0.0, %v1864
      %v1866 = vpop.f32.mrf.mxu0
      %v1867 = vadd.f32 0.0, %v1866
      %1868 = vmatmul.bf16.gmra.mxu0 %v1602
      %v1869 = vpop.f32.mrf.mxu0
      %v1870 = vadd.f32 0.0, %v1869
      %v1871 = vpop.f32.mrf.mxu0
      %1872 = vdwg.mxu0
      %1873 = vmatpush.bf16.msra.mxu0 %v1741
      %1874 = vmatpush.bf16.msra.mxu0 %v1739
      %1875 = vmatpush.bf16.msra.mxu0 %v1737
      %1876 = vmatpush.bf16.msra.mxu0 %v1735
      %1877 = vmatpush.bf16.msra.mxu0 %v1733
      %1878 = vmatpush.bf16.msra.mxu0 %v1731
      %1879 = vmatpush.bf16.msra.mxu0 %v1729
      %1880 = vmatpush.bf16.msra.mxu0 %v1727
      %1881 = vmatmul.bf16.gmra.mxu0 %v1595
      %v1882 = vpop.f32.mrf.mxu0
      %v1883 = vadd.f32 %v1850, %v1882
      %v1884 = vpop.f32.mrf.mxu0
      %v1885 = vadd.f32 %v1852, %v1884
      %1886 = vmatmul.bf16.gmra.mxu0 %v1597
      %v1887 = vpop.f32.mrf.mxu0
      %v1888 = vadd.f32 %v1855, %v1887
      %v1889 = vpop.f32.mrf.mxu0
      %v1890 = vadd.f32 %v1857, %v1889
      %1891 = vmatmul.bf16.gmra.mxu0 %v1599
      %v1892 = vpop.f32.mrf.mxu0
      %v1893 = vadd.f32 %v1860, %v1892
      %v1894 = vpop.f32.mrf.mxu0
      %v1895 = vadd.f32 %v1862, %v1894
      %1896 = vmatmul.bf16.gmra.mxu0 %v1601
      %v1897 = vpop.f32.mrf.mxu0
      %v1898 = vadd.f32 %v1865, %v1897
      %v1899 = vpop.f32.mrf.mxu0
      %v1900 = vadd.f32 %v1867, %v1899
      %1901 = vmatmul.bf16.gmra.mxu0 %v1603
      %v1902 = vpop.f32.mrf.mxu0
      %v1903 = vadd.f32 %v1870, %v1902
      %v1904 = vpop.f32.mrf.mxu0
      %1905 = vdwg.mxu0
      %v1906 = vld [vmem:[%s10] sm:$0xff]
      %v1907 = vld [vmem:[%s10 + $0x8] sm:$0xff]
      %v1908 = vld [vmem:[%s10 + $0x10] sm:$0xff]
      %v1909 = vld [vmem:[%s10 + $0x18] sm:$0xff]
      %v1910 = vld [vmem:[%s10 + $0x20] sm:$0xff]
      %v1911 = vld [vmem:[%s10 + $0x28] sm:$0xff]
      %v1912 = vld [vmem:[%s10 + $0x30] sm:$0xff]
      %v1913 = vld [vmem:[%s10 + $0x38] sm:$0xff]
      %1915 = vset.pattern.permute.xlu0 0
      %1916 = vperm.xlu0 %1915, %v1906
      %v1917 = vpop.permute.xlu0 %1916
      %1920 = vset.pattern.permute.xlu0 0
      %1921 = vperm.xlu0 %1920, %v1907
      %v1922 = vpop.permute.xlu0 %1921
      %1925 = vset.pattern.permute.xlu0 0
      %1926 = vperm.xlu0 %1925, %v1908
      %v1927 = vpop.permute.xlu0 %1926
      %1930 = vset.pattern.permute.xlu0 0
      %1931 = vperm.xlu0 %1930, %v1909
      %v1932 = vpop.permute.xlu0 %1931
      %1935 = vset.pattern.permute.xlu0 0
      %1936 = vperm.xlu0 %1935, %v1910
      %v1937 = vpop.permute.xlu0 %1936
      %1940 = vset.pattern.permute.xlu0 0
      %1941 = vperm.xlu0 %1940, %v1911
      %v1942 = vpop.permute.xlu0 %1941
      %1945 = vset.pattern.permute.xlu0 0
      %1946 = vperm.xlu0 %1945, %v1912
      %v1947 = vpop.permute.xlu0 %1946
      %1950 = vset.pattern.permute.xlu0 0
      %1951 = vperm.xlu0 %1950, %v1913
      %v1952 = vpop.permute.xlu0 %1951
      %v1954 = vadd.f32 %v1817, %v1917
      %v1955 = vadd.f32 %v1883, %v1917
      %v1956 = vadd.f32 %v1819, %v1922
      %v1957 = vadd.f32 %v1885, %v1922
      %v1958 = vadd.f32 %v1822, %v1927
      %v1959 = vadd.f32 %v1888, %v1927
      %v1960 = vadd.f32 %v1824, %v1932
      %v1961 = vadd.f32 %v1890, %v1932
      %v1962 = vadd.f32 %v1827, %v1937
      %v1963 = vadd.f32 %v1893, %v1937
      %v1964 = vadd.f32 %v1829, %v1942
      %v1965 = vadd.f32 %v1895, %v1942
      %v1966 = vadd.f32 %v1832, %v1947
      %v1967 = vadd.f32 %v1898, %v1947
      %v1968 = vadd.f32 %v1834, %v1952
      %v1969 = vadd.f32 %v1900, %v1952
      %v1970 = vmax.f32 %v1954, 0.0
      %v1971 = vmax.f32 %v1955, 0.0
      %v1972 = vmax.f32 %v1956, 0.0
      %v1973 = vmax.f32 %v1957, 0.0
      %v1974 = vmax.f32 %v1958, 0.0
      %v1975 = vmax.f32 %v1959, 0.0
      %v1976 = vmax.f32 %v1960, 0.0
      %v1977 = vmax.f32 %v1961, 0.0
      %v1978 = vmax.f32 %v1962, 0.0
      %v1979 = vmax.f32 %v1963, 0.0
      %v1980 = vmax.f32 %v1964, 0.0
      %v1981 = vmax.f32 %v1965, 0.0
      %v1982 = vmax.f32 %v1966, 0.0
      %v1983 = vmax.f32 %v1967, 0.0
      %v1984 = vmax.f32 %v1968, 0.0
      %v1985 = vmax.f32 %v1969, 0.0
      %v1986 = vpack.c.bf16 %v1972, %v1970
      %v1987 = vpack.c.bf16 %v1973, %v1971
      %v1988 = vpack.c.bf16 %v1976, %v1974
      %v1989 = vpack.c.bf16 %v1977, %v1975
      %v1990 = vpack.c.bf16 %v1980, %v1978
      %v1991 = vpack.c.bf16 %v1981, %v1979
      %v1992 = vpack.c.bf16 %v1984, %v1982
      %v1993 = vpack.c.bf16 %v1985, %v1983
      %v1994 = vld [vmem:[%s11] sm:$0x3]
      %v1996 = vsel %vm761, %v1994, 0
      %1998 = vmatpush.bf16.msra.mxu0 0
      %1999 = vmatpush.bf16.msra.mxu0 0
      %2000 = vmatpush.bf16.msra.mxu0 0
      %2001 = vmatpush.bf16.msra.mxu0 0
      %2002 = vmatpush.bf16.msra.mxu0 %v1992
      %2003 = vmatpush.bf16.msra.mxu0 %v1990
      %2004 = vmatpush.bf16.msra.mxu0 %v1988
      %2005 = vmatpush.bf16.msra.mxu0 %v1986
      %2006 = vmatmul.bf16.gmra.mxu0 %v1996
      %v2007 = vpop.f32.mrf.mxu0
      %v2008 = vadd.f32 0.0, %v2007
      %v2009 = vpop.f32.mrf.mxu0
      %2010 = vdwg.mxu0
      %2011 = vmatpush.bf16.msra.mxu0 0
      %2012 = vmatpush.bf16.msra.mxu0 0
      %2013 = vmatpush.bf16.msra.mxu0 0
      %2014 = vmatpush.bf16.msra.mxu0 0
      %2015 = vmatpush.bf16.msra.mxu0 %v1993
      %2016 = vmatpush.bf16.msra.mxu0 %v1991
      %2017 = vmatpush.bf16.msra.mxu0 %v1989
      %2018 = vmatpush.bf16.msra.mxu0 %v1987
      %2019 = vmatmul.bf16.gmra.mxu0 %v1996
      %v2020 = vpop.f32.mrf.mxu0
      %v2021 = vadd.f32 0.0, %v2020
      %v2022 = vpop.f32.mrf.mxu0
      %2023 = vdwg.mxu0
      %v2024 = vadd.f32 %v1837, %v2008
      %v2025 = vadd.f32 %v1903, %v2021
      %v2026 = vld [vmem:[%s12] sm:$0x7]
      %2028 = vset.pattern.permute.xlu0 0
      %2029 = vperm.xlu0 %2028, %v2026
      %v2030 = vpop.permute.xlu0 %2029
      %v2032 = vadd.f32 %v2024, %v2030
      %v2033 = vadd.f32 %v2025, %v2030
      %v2034 = vtanh.pop %v2032
      %v2035 = vtanh.pop %v2033
      %v2038 = vrot.slane %v2035, 4
      %vm2039 = vcmask 1043456
      %v2040 = vsel %vm2039, %v2034, %v2038
      %2042 = vst [vmem:[%s442] sm:$0x77] %v2040
      %s2043 = smul.u32 2, %s24
      %p2044 = scmp.lt.s32.totalorder %s2043, 3
      %s2045 = scalar_select %p2044, %s2043, 3
      %s2046 = smul.addr %s2045, 4
      %s2047 = scalar_lea.vmem %s13, %s2046
      // Predicated region
      $region73: #{_mulutc_forward_impl.1} parent=71 // pred_check
        %p2048 = pneg %p320
      $region74: #{_mulutc_forward_impl.1} parent=71 // pred_check_branch
        %2050 = sbr.rel (%p2048) target = $region76
      $region75: #{_mulutc_forward_impl.1} parent=71 // pred_region
        %s2051 = smul.u32 2, %s24
      $region76: #{_mulutc_forward_impl.1} parent=71 // pred_fallthru
        _
    $region72: #{_mulutc_forward_impl.1} parent=5 // pred_fallthru
      _
    %p2052 = scmp.le.s32.totalorder 2, %s19
    // Predicated region
    $region77: #{_mulutc_forward_impl.1} parent=5 // pred_check
      %p2053 = pneg %p2052
    $region78: #{_mulutc_forward_impl.1} parent=5 // pred_check_branch
      %2055 = sbr.rel (%p2053) target = $region80
    $region79: #{_mulutc_forward_impl.1} parent=5 // pred_region
      %s2056 = ssub.s32 %s19, 2
      // Predicated region
      $region81: #{_mulutc_forward_impl.1} parent=79 // pred_check
        %p2057 = pneg %p326
      $region82: #{_mulutc_forward_impl.1} parent=79 // pred_check_branch
        %2059 = sbr.rel (%p2057) target = $region84
      $region83: #{_mulutc_forward_impl.1} parent=79 // pred_region
        %s2060 = smul.u32 2, %s25
        %p2061 = scmp.lt.s32.totalorder %s2060, 3
        %s2062 = scalar_select %p2061, %s2060, 3
        %s2063 = smul.addr %s2062, 4
        %s2064 = scalar_lea.vmem %s13, %s2063
      $region84: #{_mulutc_forward_impl.1} parent=79 // pred_fallthru
        _
    $region80: #{_mulutc_forward_impl.1} parent=5 // pred_fallthru
      _
  $region6: #{_mulutc_forward_impl.1} parent=0 // loop_footer
    %s23 = sadd.s32 1, %s19
  $region7: #{_mulutc_forward_impl.1} parent=0 // loop_footer_branch
    %18 = sbr.rel target = $region3
  $region8: #{_mulutc_forward_impl.1} parent=0 // loop_exit
    _

</llo_original>
